<compile_context>
chip_gen: v7x
topology: tpu7x:2x2x1
jax: 0.10.0
libtpu: 0.0.40
codegen_flags: <defaults>
</compile_context>

<pallas_src>
import jax
import jax.numpy as jnp
from jax.experimental import pallas as pl
from jax.experimental.pallas import tpu as pltpu

BIT_WIDTH = 8                          # act_quant bit width
MAX_VAL = 6.0                          # QuantReLU-style max_val used for the scale
_INT_MAX = float(2 ** BIT_WIDTH - 1)   # 255.0 for 8-bit unsigned
_SMALL_TENSOR_BYTES = 256 * 1024       # below this, fused jnp beats a kernel dispatch


def _round_up(v: int, m: int) -> int:
    return -(-v // m) * m


def _tile_bytes_for_device() -> int:
    """Per-block byte budget, tuned per TPU generation."""
    try:
        kind = jax.devices()[0].device_kind.lower()
    except Exception:  # pragma: no cover - defensive
        kind = ""
    # v5e (~0.82 TB/s HBM): 2 MiB steps already make the ~0.35us step overhead <7%.
    if "v5 lite" in kind or "v5e" in kind or "v5litepod" in kind:
        return 2 * 1024 * 1024
    # v6e / v7x (1.4-3.2 TB/s): ~4 MiB blocks; double-buffered in+out = 16 MiB VMEM.
    return 4 * 1024 * 1024


def _quant_relu_kernel(scale_ref, x_ref, o_ref):
    """Elementwise ReLU + unsigned fake-quant on one (block_rows, lane) tile."""
    scale = scale_ref[0]                 # per-tensor scale (SMEM scalar, f32)
    inv_scale = 1.0 / scale              # scalar recip, once per grid step (free slot)
    x = x_ref[...].astype(jnp.float32)
    y = jnp.maximum(x, 0.0)                                  # act_impl: ReLU
    q = jnp.clip(jnp.round(y * inv_scale), 0.0, _INT_MAX)    # int quant + clamp
    o_ref[...] = (q * scale).astype(o_ref.dtype)             # dequantized output


def _quant_relu_jnp(x: jax.Array, scale_f32: jax.Array) -> jax.Array:
    """Fused XLA fallback (tiny tensors / ragged tail). Same math as the kernel."""
    inv_scale = jnp.float32(1.0) / scale_f32
    y = jnp.maximum(x.astype(jnp.float32), 0.0)
    q = jnp.clip(jnp.round(y * inv_scale), 0.0, _INT_MAX)
    return (q * scale_f32).astype(x.dtype)


def _run_kernel(x2: jax.Array, scale_arr: jax.Array, out_dtype,
                *, donate_input: bool = False) -> jax.Array:
    """Run the Pallas kernel over a lane-dense (rows, lane) view."""
    rows, lane = x2.shape
    itemsize = jnp.dtype(x2.dtype).itemsize
    tile_bytes = _tile_bytes_for_device()
    max_block_rows = max(8, (tile_bytes // (itemsize * lane)) // 8 * 8)

    if rows > max_block_rows:
        block_rows = max_block_rows
    elif rows >= 16:
        # A single max-size block would collapse the grid to one step; split in
        # two so dimension_semantics=("parallel",) can use both v7x TensorCores.
        block_rows = _round_up(pl.cdiv(rows, 2), 8)
    else:
        block_rows = rows  # full extent (only reachable for tiny inputs)

    grid = (pl.cdiv(rows, block_rows),)  # ragged last block handled by Pallas

    extra = {}
    if donate_input and x2.dtype == jnp.dtype(out_dtype):
        extra["input_output_aliases"] = {1: 0}  # alias activation buffer -> output

    return pl.pallas_call(
        _quant_relu_kernel,
        out_shape=jax.ShapeDtypeStruct((rows, lane), out_dtype),
        grid=grid,
        in_specs=[
            pl.BlockSpec(memory_space=pltpu.MemorySpace.SMEM),   # (1,) scale
            pl.BlockSpec((block_rows, lane), lambda i: (i, 0)),  # activation tile
        ],
        out_specs=pl.BlockSpec((block_rows, lane), lambda i: (i, 0)),
        compiler_params=pltpu.CompilerParams(
            dimension_semantics=("parallel",),
            vmem_limit_bytes=48 << 20,
        ),
        **extra,
    )(scale_arr, x2)


def quant_nonlinear_act(x: jax.Array, scale: jax.Array,
                        *, donate_input: bool = False) -> jax.Array:
    """Pallas implementation of QuantNonLinearActLayer.forward (value path).

    Args:
      x: float array of any shape (e.g. NCHW activations).
      scale: scalar float quantization scale (learned parameter).
      donate_input: alias the activation buffer to the output inside the kernel
        (only safe if the caller does not reuse x afterwards).
    Returns:
      Fake-quantized activation, same shape/dtype as x.
    """
    orig_shape = x.shape
    orig_dtype = x.dtype
    total = x.size
    scale_f32 = jnp.asarray(scale, jnp.float32).reshape(())

    if total == 0:
        return x

    # Tiny activations: let XLA fuse the elementwise chain with the producer;
    # kernel dispatch / pipeline setup would dominate here.
    if total * jnp.dtype(orig_dtype).itemsize < _SMALL_TENSOR_BYTES:
        return _quant_relu_jnp(x, scale_f32)

    flat = x.reshape(-1)
    scale_arr = scale_f32.reshape(1)

    # Pick the widest lane-dense width that divides the element count so the
    # common (128-aligned) case needs no extra HBM copies at all.
    lane = None
    for cand in (1024, 512, 256, 128):
        if total % cand == 0:
            lane = cand
            break

    if lane is not None:
        rows = total // lane
        out2 = _run_kernel(flat.reshape(rows, lane), scale_arr, orig_dtype,
                           donate_input=donate_input)
        return out2.reshape(orig_shape)

    # Ragged element count: no full-tensor pad/slice. The 128-aligned prefix
    # goes through the kernel; the < 1024-element tail is a tiny jnp expression.
    lane = 1024
    aligned = (total // lane) * lane
    head = _run_kernel(flat[:aligned].reshape(-1, lane), scale_arr, orig_dtype,
                       donate_input=False)
    tail = _quant_relu_jnp(flat[aligned:], scale_f32)
    # TODO(synk): the concatenate still costs one assembly pass over the tensor;
    # a fully copy-free ragged path would need in-kernel masked 1-D stores.
    out_flat = jnp.concatenate([head.reshape(-1), tail])
    return out_flat.reshape(orig_shape)


def _reference(x, scale, *, use_reciprocal: bool):
    """Pure-jnp reference. use_reciprocal=False matches brevitas divide semantics."""
    s = jnp.float32(scale)
    y = jnp.maximum(x.astype(jnp.float32), 0.0)
    pre = y * (jnp.float32(1.0) / s) if use_reciprocal else y / s
    q = jnp.clip(jnp.round(pre), 0.0, _INT_MAX)
    return (q * s).astype(x.dtype)


if __name__ == "__main__":
    key = jax.random.PRNGKey(0)

    # Deterministic parameter init (learned scale in brevitas ParameterScaling).
    scale = jnp.float32(MAX_VAL / (2.0 ** BIT_WIDTH - 1.0))

    def check(name, x):
        out = jax.block_until_ready(quant_nonlinear_act(x, scale))
        assert out.shape == x.shape and out.dtype == x.dtype, name
        # Exact match against the multiply-by-reciprocal form the kernel uses.
        ref_mul = _reference(x, scale, use_reciprocal=True)
        assert jnp.allclose(out, ref_mul, atol=1e-6), f"{name}: mismatch vs reference"
        # At most one quantization step away from the exact divide form
        # (1-ulp round-boundary flips only; harmless for fake-quant training).
        ref_div = _reference(x, scale, use_reciprocal=False)
        max_err = float(jnp.max(jnp.abs(out.astype(jnp.float32) -
                                        ref_div.astype(jnp.float32))))
        assert max_err <= float(scale) * 1.001, f"{name}: {max_err} vs divide ref"

    k0, k1, k2 = jax.random.split(key, 3)

    # Small NCHW activation tensor, consistent with a conv-net activation layer
    # (takes the fused-jnp fast path by design).
    check("small", jax.random.normal(k0, (2, 4, 16, 16), dtype=jnp.float32) * 3.0)

    # Larger activation: exercises the Pallas kernel with a multi-block grid
    # (>= 2 blocks so both v7x TensorCores get work) and a partial last block.
    check("multi", jax.random.normal(k1, (8, 17, 64, 64), dtype=jnp.float32) * 3.0)

    # Ragged (non-128-multiple) element count above the kernel threshold:
    # exercises the aligned-prefix kernel + jnp tail path.
    check("ragged", jax.random.normal(k2, (3, 7, 111, 113), dtype=jnp.float32) * 3.0)

    # TODO(synk): return_quant_tensor=True path (packing scale/bit_width/signed
    # metadata into a QuantTensor) and export_mode handlers have no array-level
    # Pallas equivalent; only the dequantized value tensor is produced here.
    print("KERNEL_OK")
</pallas_src>

<mosaic_0001>
module attributes {stable_mosaic.version = 11 : i64} {
  func.func @_quant_relu_kernel(%arg0: i32, %arg1: memref<1xf32, #tpu.memory_space<smem>>, %arg2: memref<272x1024xf32, #tpu.memory_space<vmem>>, %arg3: memref<272x1024xf32, #tpu.memory_space<vmem>>) attributes {dimension_semantics = [#tpu.dimension_semantics<parallel>], iteration_bounds = array<i64: 2>, scalar_prefetch = 0 : i64, scratch_operands = 0 : i64, tpu.core_type = #tpu.core_type<tc>, window_params = [{transform_indices = @transform_0, window_bounds = array<i64: 1>}, {transform_indices = @transform_1, window_bounds = array<i64: 272, 1024>}, {transform_indices = @transform_2, window_bounds = array<i64: 272, 1024>}]} {
    %c0 = arith.constant 0 : index
    %0 = memref.load %arg1[%c0] : memref<1xf32, #tpu.memory_space<smem>>
    %cst = arith.constant 1.000000e+00 : f32
    %1 = arith.divf %cst, %0 : f32
    %c0_0 = arith.constant 0 : index
    %c0_1 = arith.constant 0 : index
    %2 = vector.load %arg2[%c0_0, %c0_1] : memref<272x1024xf32, #tpu.memory_space<vmem>>, vector<272x1024xf32>
    %cst_2 = arith.constant 0.000000e+00 : f32
    %3 = vector.broadcast %cst_2 : f32 to vector<272x1024xf32>
    %4 = arith.maximumf %2, %3 : vector<272x1024xf32>
    %5 = vector.broadcast %1 : f32 to vector<272x1024xf32>
    %6 = arith.mulf %4, %5 : vector<272x1024xf32>
    %7 = math.roundeven %6 : vector<272x1024xf32>
    %cst_3 = arith.constant 0.000000e+00 : f32
    %cst_4 = arith.constant 2.550000e+02 : f32
    %8 = vector.broadcast %cst_3 : f32 to vector<272x1024xf32>
    %9 = arith.maximumf %8, %7 : vector<272x1024xf32>
    %10 = vector.broadcast %cst_4 : f32 to vector<272x1024xf32>
    %11 = arith.minimumf %10, %9 : vector<272x1024xf32>
    %12 = vector.broadcast %0 : f32 to vector<272x1024xf32>
    %13 = arith.mulf %11, %12 : vector<272x1024xf32>
    %c0_5 = arith.constant 0 : index
    %c0_6 = arith.constant 0 : index
    %14 = vector.load %arg3[%c0_5, %c0_6] : memref<272x1024xf32, #tpu.memory_space<vmem>>, vector<272x1024xf32>
    tpu.vector_store %arg3[%c0_5, %c0_6], %13 {strides = array<i32>} : memref<272x1024xf32, #tpu.memory_space<vmem>>, vector<272x1024xf32>,
    return
  }
  func.func @transform_0(%arg0: i32) -> i32 {
    %c0_i32 = arith.constant 0 : i32
    %c0_i32_0 = arith.constant 0 : i32
    return %c0_i32 : i32
  }
  func.func @transform_1(%arg0: i32) -> (i32, i32) {
    %c0_i32 = arith.constant 0 : i32
    %c0_i32_0 = arith.constant 0 : i32
    return %arg0, %c0_i32 : i32, i32
  }
  func.func @transform_2(%arg0: i32) -> (i32, i32) {
    %c0_i32 = arith.constant 0 : i32
    %c0_i32_0 = arith.constant 0 : i32
    return %arg0, %c0_i32 : i32, i32
  }
}

</mosaic_0001>

<llo_original>
// kernel: tpu_custom_call.1
$region0: #{tpu_custom_call.1}
  #allocation0 [shape = 'u32[]', space=smem, size = 0x4, offset = 0x4, fixed_abs, tag = 'smem constant byte address 0x4 - core index']
  #allocation1 [shape = 'u32[144,128]{1,0:T(1,128)}', space=vmem, size = 0x12000, scoped, tag = 'internal scratch']
  #allocation2 [shape = 'f32[1]{0:T(128)S(6)}', space=smem, size = 0x200, scoped, tag = 'scoped memory for tpu_custom_call.1']
  %s0 = inlined_call_operand.<no memory space> [shape: f32[1], index: 0, kind: input, shape index: {}]
  %s1 = inlined_call_operand.hbm [shape: f32[544,1024], index: 1, kind: input, shape index: {}]
  %s2 = inlined_call_operand.hbm [shape: f32[544,1024], index: 2, kind: output, shape index: {}]
  %s3 = sld [smem:[#allocation0]]
  $region45: #{tpu_custom_call.1} parent=0
    _
  %s5 = ssub.s32 1, %s3
  %s6 = scalar_select 0, %s5, %s3
  %7 = sst [smem:[#allocation2]] %s0
  $region1: #{tpu_custom_call.1} parent=0
    #allocation3 [shape = 'u8[2228224]{0}', space=vmem, size = 0x220000, scoped, tag = 'input window, operand 1']
    #allocation4 [shape = 's32[2]{0}', space=sflag, size = 0x8, scoped, tag = 'scoped memory for tpu_custom_call.1']
    #allocation5 [shape = 's32[2]{0}', space=sflag, size = 0x8, scoped, tag = 'scoped memory for tpu_custom_call.1']
    #allocation6 [shape = 'u8[2228224]{0}', space=vmem, size = 0x220000, scoped, tag = 'output window, operand 0']
    %8 = vsyncpa [#allocation4], 0
    %s9 = scalar_lea.sflag [#allocation4], 1
    %10 = vsyncpa %s9, 0
    %11 = vsyncpa [#allocation5], 0
    %s12 = scalar_lea.sflag [#allocation5], 1
    %13 = vsyncpa %s12, 0
    loop: start=0, step=1, limit=4
    $region2: #{tpu_custom_call.1} parent=1 // loop_pre_header
      _
    $region3: #{tpu_custom_call.1} parent=1 // loop_header
      %s15 = sphi 0, %s19
      %p16 = scmp.ge.s32.totalorder %s15, 4
      %s23 = sphi 0, %s23
      %s25 = sphi 0, %s23
      %s26 = sphi 0, %s25
      %s40 = sphi 0, %s26
      %s46 = sphi 0, %s48
      %s49 = sphi 0, %s46
      %s50 = sphi 0, %s49
      %s66 = sphi 0, %s50
      %s72 = sphi 0, %s74
      %s75 = sphi 0, %s72
      %s76 = sphi 0, %s75
      %s92 = sphi 0, %s76
    $region4: #{tpu_custom_call.1} parent=1 // loop_header_branch
      %18 = sbr.rel (%p16) target = $region8
    $region5: #{tpu_custom_call.1} parent=1 // loop_body
      %s20 = ssub.s32 %s15, 1
      %s21 = ssub.s32 %s15, 2
      %s22 = sadd.s32 %s15, 1
      %s24 = sadd.s32 %s23, 1
      %p27 = scmp.eq.s32.totalorder %s15, 1
      %p28 = scmp.ne.s32.totalorder %s23, %s25
      %p29 = scmp.eq.s32.totalorder %s15, 0
      %p30 = por %p28, %p29
      %p31 = scmp.ne.s32.totalorder %s23, %s25
      %p32 = scmp.eq.s32.totalorder %s20, 1
      %p33 = por %p31, %p32
      %p34 = scmp.ne.s32.totalorder %s25, %s26
      %p35 = scmp.eq.s32.totalorder %s20, 0
      %p36 = por %p34, %p35
      %p37 = scmp.ne.s32.totalorder %s25, %s26
      %p38 = scmp.eq.s32.totalorder %s21, 1
      %p39 = por %p37, %p38
      %p41 = scmp.ne.s32.totalorder %s26, %s40
      %p42 = scmp.eq.s32.totalorder %s21, 0
      %p43 = por %p41, %p42
      %s44 = ssub.s32 %s15, %s22
      %p45 = scmp.eq.s32.totalorder %s44, 0
      %s47 = sadd.s32 %s46, 1
      %s48 = scalar_select %p45, %s46, %s47
      %p51 = pneg %p45
      %p52 = scmp.eq.s32.totalorder %s15, 1
      %p53 = por %p51, %p52
      %p54 = scmp.ne.s32.totalorder %s46, %s49
      %p55 = scmp.eq.s32.totalorder %s15, 0
      %p56 = por %p54, %p55
      %p57 = scmp.ne.s32.totalorder %s46, %s49
      %p58 = scmp.eq.s32.totalorder %s20, 1
      %p59 = por %p57, %p58
      %p60 = scmp.ne.s32.totalorder %s49, %s50
      %p61 = scmp.eq.s32.totalorder %s20, 0
      %p62 = por %p60, %p61
      %p63 = scmp.ne.s32.totalorder %s49, %s50
      %p64 = scmp.eq.s32.totalorder %s21, 1
      %p65 = por %p63, %p64
      %p67 = scmp.ne.s32.totalorder %s50, %s66
      %p68 = scmp.eq.s32.totalorder %s21, 0
      %p69 = por %p67, %p68
      %s70 = ssub.s32 %s15, %s22
      %p71 = scmp.eq.s32.totalorder %s70, 0
      %s73 = sadd.s32 %s72, 1
      %s74 = scalar_select %p71, %s72, %s73
      %p77 = pneg %p71
      %p78 = scmp.eq.s32.totalorder %s15, 1
      %p79 = por %p77, %p78
      %p80 = scmp.ne.s32.totalorder %s72, %s75
      %p81 = scmp.eq.s32.totalorder %s15, 0
      %p82 = por %p80, %p81
      %p83 = scmp.ne.s32.totalorder %s72, %s75
      %p84 = scmp.eq.s32.totalorder %s20, 1
      %p85 = por %p83, %p84
      %p86 = scmp.ne.s32.totalorder %s75, %s76
      %p87 = scmp.eq.s32.totalorder %s20, 0
      %p88 = por %p86, %p87
      %p89 = scmp.ne.s32.totalorder %s75, %s76
      %p90 = scmp.eq.s32.totalorder %s21, 1
      %p91 = por %p89, %p90
      %p93 = scmp.ne.s32.totalorder %s76, %s92
      %p94 = scmp.eq.s32.totalorder %s21, 0
      %p95 = por %p93, %p94
      %p96 = scmp.le.s32.totalorder 1, %s15
      %p97 = scmp.lt.s32.totalorder %s15, 3
      %p98 = pnand %p96, %p97
      %p99 = pneg %p98
      // Predicated region
      $region9: #{tpu_custom_call.1} parent=5 // pred_check
        _
      $region10: #{tpu_custom_call.1} parent=5 // pred_check_branch
        %101 = sbr.rel (%p98) target = $region12
      $region11: #{tpu_custom_call.1} parent=5 // pred_region
        %s102 = ssub.s32 %s15, 1
        // Predicated region
        $region13: #{tpu_custom_call.1} parent=11 // pred_check
          %p103 = pneg %p36
        $region14: #{tpu_custom_call.1} parent=11 // pred_check_branch
          %105 = sbr.rel (%p103) target = $region16
        $region15: #{tpu_custom_call.1} parent=11 // pred_region
          _
        $region16: #{tpu_custom_call.1} parent=11 // pred_fallthru
          _
      $region12: #{tpu_custom_call.1} parent=5 // pred_fallthru
        _
      %p106 = scmp.lt.s32.totalorder %s15, 2
      // Predicated region
      $region17: #{tpu_custom_call.1} parent=5 // pred_check
        %p107 = pneg %p106
      $region18: #{tpu_custom_call.1} parent=5 // pred_check_branch
        %109 = sbr.rel (%p107) target = $region20
      $region19: #{tpu_custom_call.1} parent=5 // pred_region
        // Predicated region
        $region21: #{tpu_custom_call.1} parent=19 // pred_check
          %p110 = pneg %p56
        $region22: #{tpu_custom_call.1} parent=19 // pred_check_branch
          %112 = sbr.rel (%p110) target = $region24
        $region23: #{tpu_custom_call.1} parent=19 // pred_region
          %s113 = sand.u32 %s46, 1
          %s114 = scalar_lea.sflag [#allocation4], %s113
          %s115 = sand.u32 %s46, 1
          %s116 = smul.addr %s115, 2176
          %s117 = scalar_lea.vmem [#allocation3], %s116
          %s118 = smul.u32 34, %s15
          %s120 = ssub.s32 34816, 34816
          %121 = vsyncadd %s114, %s120
          %s122 = smul.addr %s118, 8
          %s123 = smul.addr %s122, 128
          %s124 = scalar_lea.hbm %s1, %s123
          %s125 = sshll.u32 %s117, 4
          %s126 = int_to_ptr.vmem [resolvable:$true] %s125
          %131 = dma.hbm_to_vmem [thread:$0]  %s124, 34816, %s126, %s114, 1024, 1024, 64
        $region24: #{tpu_custom_call.1} parent=19 // pred_fallthru
          _
      $region20: #{tpu_custom_call.1} parent=5 // pred_fallthru
        _
      %p132 = scmp.le.s32.totalorder 1, %s15
      %p133 = scmp.lt.s32.totalorder %s15, 3
      %p134 = pnand %p132, %p133
      %p135 = pneg %p134
      // Predicated region
      $region25: #{tpu_custom_call.1} parent=5 // pred_check
        _
      $region26: #{tpu_custom_call.1} parent=5 // pred_check_branch
        %137 = sbr.rel (%p134) target = $region28
      $region27: #{tpu_custom_call.1} parent=5 // pred_region
        %s138 = ssub.s32 %s15, 1
        %s139 = sand.u32 %s49, 1
        %s140 = scalar_lea.sflag [#allocation4], %s139
        %s141 = sand.u32 %s49, 1
        %s142 = smul.addr %s141, 2176
        %s143 = scalar_lea.vmem [#allocation3], %s142
        // Predicated region
        $region29: #{tpu_custom_call.1} parent=27 // pred_check
          %p144 = pneg %p62
        $region30: #{tpu_custom_call.1} parent=27 // pred_check_branch
          %146 = sbr.rel (%p144) target = $region32
        $region31: #{tpu_custom_call.1} parent=27 // pred_region
          %147 = dma.done %s140, 34816
        $region32: #{tpu_custom_call.1} parent=27 // pred_fallthru
          _
        %p148 = pneg %p36
        %p149 = pneg %p33
        %s150 = sand.u32 %s49, 1
        %s151 = scalar_lea.sflag [#allocation4], %s150
        %s152 = sand.u32 %s49, 1
        %s153 = smul.addr %s152, 2176
        %s154 = scalar_lea.vmem [#allocation3], %s153
        %p155 = pneg %p62
        %p156 = pneg %p59
        %p157 = pneg %p88
        %p158 = pneg %p85
        %s159 = sand.u32 %s75, 1
        %s160 = scalar_lea.sflag [#allocation5], %s159
        %s161 = sand.u32 %s75, 1
        %s162 = smul.addr %s161, 2176
        %s163 = scalar_lea.vmem [#allocation6], %s162
        %s164 = smul.u32 34, %s20
        %s165 = smul.u32 34, %s20
        %s166 = sld [smem:[#allocation2]]
        %v167 = vstv %s166
        %v168 = vrcp.pop %v167
        %s169 = vtos %v168
        %v170 = vld [vmem:[%s143] sm:$0xff]
        %v171 = vld [vmem:[%s143 + $0x8] sm:$0xff]
        %v172 = vld [vmem:[%s143 + $0x10] sm:$0xff]
        %v173 = vld [vmem:[%s143 + $0x18] sm:$0xff]
        %v174 = vld [vmem:[%s143 + $0x20] sm:$0xff]
        %v175 = vld [vmem:[%s143 + $0x28] sm:$0xff]
        %v176 = vld [vmem:[%s143 + $0x30] sm:$0xff]
        %v177 = vld [vmem:[%s143 + $0x38] sm:$0xff]
        %v178 = vld [vmem:[%s143 + $0x40] sm:$0xff]
        %v179 = vld [vmem:[%s143 + $0x48] sm:$0xff]
        %v180 = vld [vmem:[%s143 + $0x50] sm:$0xff]
        %v181 = vld [vmem:[%s143 + $0x58] sm:$0xff]
        %v182 = vld [vmem:[%s143 + $0x60] sm:$0xff]
        %v183 = vld [vmem:[%s143 + $0x68] sm:$0xff]
        %v184 = vld [vmem:[%s143 + $0x70] sm:$0xff]
        %v185 = vld [vmem:[%s143 + $0x78] sm:$0xff]
        %v186 = vld [vmem:[%s143 + $0x80] sm:$0xff]
        %v187 = vld [vmem:[%s143 + $0x88] sm:$0xff]
        %v188 = vld [vmem:[%s143 + $0x90] sm:$0xff]
        %v189 = vld [vmem:[%s143 + $0x98] sm:$0xff]
        %v190 = vld [vmem:[%s143 + $0xa0] sm:$0xff]
        %v191 = vld [vmem:[%s143 + $0xa8] sm:$0xff]
        %v192 = vld [vmem:[%s143 + $0xb0] sm:$0xff]
        %v193 = vld [vmem:[%s143 + $0xb8] sm:$0xff]
        %v194 = vld [vmem:[%s143 + $0xc0] sm:$0xff]
        %v195 = vld [vmem:[%s143 + $0xc8] sm:$0xff]
        %v196 = vld [vmem:[%s143 + $0xd0] sm:$0xff]
        %v197 = vld [vmem:[%s143 + $0xd8] sm:$0xff]
        %v198 = vld [vmem:[%s143 + $0xe0] sm:$0xff]
        %v199 = vld [vmem:[%s143 + $0xe8] sm:$0xff]
        %v200 = vld [vmem:[%s143 + $0xf0] sm:$0xff]
        %v201 = vld [vmem:[%s143 + $0xf8] sm:$0xff]
        %v202 = vld [vmem:[%s143 + $0x100] sm:$0xff]
        %v203 = vld [vmem:[%s143 + $0x108] sm:$0xff]
        %v204 = vld [vmem:[%s143 + $0x110] sm:$0xff]
        %v205 = vld [vmem:[%s143 + $0x118] sm:$0xff]
        %v206 = vld [vmem:[%s143 + $0x120] sm:$0xff]
        %v207 = vld [vmem:[%s143 + $0x128] sm:$0xff]
        %v208 = vld [vmem:[%s143 + $0x130] sm:$0xff]
        %v209 = vld [vmem:[%s143 + $0x138] sm:$0xff]
        %v210 = vld [vmem:[%s143 + $0x140] sm:$0xff]
        %v211 = vld [vmem:[%s143 + $0x148] sm:$0xff]
        %v212 = vld [vmem:[%s143 + $0x150] sm:$0xff]
        %v213 = vld [vmem:[%s143 + $0x158] sm:$0xff]
        %v214 = vld [vmem:[%s143 + $0x160] sm:$0xff]
        %v215 = vld [vmem:[%s143 + $0x168] sm:$0xff]
        %v216 = vld [vmem:[%s143 + $0x170] sm:$0xff]
        %v217 = vld [vmem:[%s143 + $0x178] sm:$0xff]
        %v218 = vld [vmem:[%s143 + $0x180] sm:$0xff]
        %v219 = vld [vmem:[%s143 + $0x188] sm:$0xff]
        %v220 = vld [vmem:[%s143 + $0x190] sm:$0xff]
        %v221 = vld [vmem:[%s143 + $0x198] sm:$0xff]
        %v222 = vld [vmem:[%s143 + $0x1a0] sm:$0xff]
        %v223 = vld [vmem:[%s143 + $0x1a8] sm:$0xff]
        %v224 = vld [vmem:[%s143 + $0x1b0] sm:$0xff]
        %v225 = vld [vmem:[%s143 + $0x1b8] sm:$0xff]
        %v226 = vld [vmem:[%s143 + $0x1c0] sm:$0xff]
        %v227 = vld [vmem:[%s143 + $0x1c8] sm:$0xff]
        %v228 = vld [vmem:[%s143 + $0x1d0] sm:$0xff]
        %v229 = vld [vmem:[%s143 + $0x1d8] sm:$0xff]
        %v230 = vld [vmem:[%s143 + $0x1e0] sm:$0xff]
        %v231 = vld [vmem:[%s143 + $0x1e8] sm:$0xff]
        %v232 = vld [vmem:[%s143 + $0x1f0] sm:$0xff]
        %v233 = vld [vmem:[%s143 + $0x1f8] sm:$0xff]
        %v234 = vld [vmem:[%s143 + $0x200] sm:$0xff]
        %v235 = vld [vmem:[%s143 + $0x208] sm:$0xff]
        %v236 = vld [vmem:[%s143 + $0x210] sm:$0xff]
        %v237 = vld [vmem:[%s143 + $0x218] sm:$0xff]
        %v238 = vld [vmem:[%s143 + $0x220] sm:$0xff]
        %v239 = vld [vmem:[%s143 + $0x228] sm:$0xff]
        %v240 = vld [vmem:[%s143 + $0x230] sm:$0xff]
        %v241 = vld [vmem:[%s143 + $0x238] sm:$0xff]
        %v242 = vld [vmem:[%s143 + $0x240] sm:$0xff]
        %v243 = vld [vmem:[%s143 + $0x248] sm:$0xff]
        %v244 = vld [vmem:[%s143 + $0x250] sm:$0xff]
        %v245 = vld [vmem:[%s143 + $0x258] sm:$0xff]
        %v246 = vld [vmem:[%s143 + $0x260] sm:$0xff]
        %v247 = vld [vmem:[%s143 + $0x268] sm:$0xff]
        %v248 = vld [vmem:[%s143 + $0x270] sm:$0xff]
        %v249 = vld [vmem:[%s143 + $0x278] sm:$0xff]
        %v250 = vld [vmem:[%s143 + $0x280] sm:$0xff]
        %v251 = vld [vmem:[%s143 + $0x288] sm:$0xff]
        %v252 = vld [vmem:[%s143 + $0x290] sm:$0xff]
        %v253 = vld [vmem:[%s143 + $0x298] sm:$0xff]
        %v254 = vld [vmem:[%s143 + $0x2a0] sm:$0xff]
        %v255 = vld [vmem:[%s143 + $0x2a8] sm:$0xff]
        %v256 = vld [vmem:[%s143 + $0x2b0] sm:$0xff]
        %v257 = vld [vmem:[%s143 + $0x2b8] sm:$0xff]
        %v258 = vld [vmem:[%s143 + $0x2c0] sm:$0xff]
        %v259 = vld [vmem:[%s143 + $0x2c8] sm:$0xff]
        %v260 = vld [vmem:[%s143 + $0x2d0] sm:$0xff]
        %v261 = vld [vmem:[%s143 + $0x2d8] sm:$0xff]
        %v262 = vld [vmem:[%s143 + $0x2e0] sm:$0xff]
        %v263 = vld [vmem:[%s143 + $0x2e8] sm:$0xff]
        %v264 = vld [vmem:[%s143 + $0x2f0] sm:$0xff]
        %v265 = vld [vmem:[%s143 + $0x2f8] sm:$0xff]
        %v266 = vld [vmem:[%s143 + $0x300] sm:$0xff]
        %v267 = vld [vmem:[%s143 + $0x308] sm:$0xff]
        %v268 = vld [vmem:[%s143 + $0x310] sm:$0xff]
        %v269 = vld [vmem:[%s143 + $0x318] sm:$0xff]
        %v270 = vld [vmem:[%s143 + $0x320] sm:$0xff]
        %v271 = vld [vmem:[%s143 + $0x328] sm:$0xff]
        %v272 = vld [vmem:[%s143 + $0x330] sm:$0xff]
        %v273 = vld [vmem:[%s143 + $0x338] sm:$0xff]
        %v274 = vld [vmem:[%s143 + $0x340] sm:$0xff]
        %v275 = vld [vmem:[%s143 + $0x348] sm:$0xff]
        %v276 = vld [vmem:[%s143 + $0x350] sm:$0xff]
        %v277 = vld [vmem:[%s143 + $0x358] sm:$0xff]
        %v278 = vld [vmem:[%s143 + $0x360] sm:$0xff]
        %v279 = vld [vmem:[%s143 + $0x368] sm:$0xff]
        %v280 = vld [vmem:[%s143 + $0x370] sm:$0xff]
        %v281 = vld [vmem:[%s143 + $0x378] sm:$0xff]
        %v282 = vld [vmem:[%s143 + $0x380] sm:$0xff]
        %v283 = vld [vmem:[%s143 + $0x388] sm:$0xff]
        %v284 = vld [vmem:[%s143 + $0x390] sm:$0xff]
        %v285 = vld [vmem:[%s143 + $0x398] sm:$0xff]
        %v286 = vld [vmem:[%s143 + $0x3a0] sm:$0xff]
        %v287 = vld [vmem:[%s143 + $0x3a8] sm:$0xff]
        %v288 = vld [vmem:[%s143 + $0x3b0] sm:$0xff]
        %v289 = vld [vmem:[%s143 + $0x3b8] sm:$0xff]
        %v290 = vld [vmem:[%s143 + $0x3c0] sm:$0xff]
        %v291 = vld [vmem:[%s143 + $0x3c8] sm:$0xff]
        %v292 = vld [vmem:[%s143 + $0x3d0] sm:$0xff]
        %v293 = vld [vmem:[%s143 + $0x3d8] sm:$0xff]
        %v294 = vld [vmem:[%s143 + $0x3e0] sm:$0xff]
        %v295 = vld [vmem:[%s143 + $0x3e8] sm:$0xff]
        %v296 = vld [vmem:[%s143 + $0x3f0] sm:$0xff]
        %v297 = vld [vmem:[%s143 + $0x3f8] sm:$0xff]
        %v298 = vld [vmem:[%s143 + $0x400] sm:$0xff]
        %v299 = vld [vmem:[%s143 + $0x408] sm:$0xff]
        %v300 = vld [vmem:[%s143 + $0x410] sm:$0xff]
        %v301 = vld [vmem:[%s143 + $0x418] sm:$0xff]
        %v302 = vld [vmem:[%s143 + $0x420] sm:$0xff]
        %v303 = vld [vmem:[%s143 + $0x428] sm:$0xff]
        %v304 = vld [vmem:[%s143 + $0x430] sm:$0xff]
        %v305 = vld [vmem:[%s143 + $0x438] sm:$0xff]
        %v306 = vld [vmem:[%s143 + $0x440] sm:$0xff]
        %v307 = vld [vmem:[%s143 + $0x448] sm:$0xff]
        %v308 = vld [vmem:[%s143 + $0x450] sm:$0xff]
        %v309 = vld [vmem:[%s143 + $0x458] sm:$0xff]
        %v310 = vld [vmem:[%s143 + $0x460] sm:$0xff]
        %v311 = vld [vmem:[%s143 + $0x468] sm:$0xff]
        %v312 = vld [vmem:[%s143 + $0x470] sm:$0xff]
        %v313 = vld [vmem:[%s143 + $0x478] sm:$0xff]
        %v314 = vld [vmem:[%s143 + $0x480] sm:$0xff]
        %v315 = vld [vmem:[%s143 + $0x488] sm:$0xff]
        %v316 = vld [vmem:[%s143 + $0x490] sm:$0xff]
        %v317 = vld [vmem:[%s143 + $0x498] sm:$0xff]
        %v318 = vld [vmem:[%s143 + $0x4a0] sm:$0xff]
        %v319 = vld [vmem:[%s143 + $0x4a8] sm:$0xff]
        %v320 = vld [vmem:[%s143 + $0x4b0] sm:$0xff]
        %v321 = vld [vmem:[%s143 + $0x4b8] sm:$0xff]
        %v322 = vld [vmem:[%s143 + $0x4c0] sm:$0xff]
        %v323 = vld [vmem:[%s143 + $0x4c8] sm:$0xff]
        %v324 = vld [vmem:[%s143 + $0x4d0] sm:$0xff]
        %v325 = vld [vmem:[%s143 + $0x4d8] sm:$0xff]
        %v326 = vld [vmem:[%s143 + $0x4e0] sm:$0xff]
        %v327 = vld [vmem:[%s143 + $0x4e8] sm:$0xff]
        %v328 = vld [vmem:[%s143 + $0x4f0] sm:$0xff]
        %v329 = vld [vmem:[%s143 + $0x4f8] sm:$0xff]
        %v330 = vld [vmem:[%s143 + $0x500] sm:$0xff]
        %v331 = vld [vmem:[%s143 + $0x508] sm:$0xff]
        %v332 = vld [vmem:[%s143 + $0x510] sm:$0xff]
        %v333 = vld [vmem:[%s143 + $0x518] sm:$0xff]
        %v334 = vld [vmem:[%s143 + $0x520] sm:$0xff]
        %v335 = vld [vmem:[%s143 + $0x528] sm:$0xff]
        %v336 = vld [vmem:[%s143 + $0x530] sm:$0xff]
        %v337 = vld [vmem:[%s143 + $0x538] sm:$0xff]
        %v338 = vld [vmem:[%s143 + $0x540] sm:$0xff]
        %v339 = vld [vmem:[%s143 + $0x548] sm:$0xff]
        %v340 = vld [vmem:[%s143 + $0x550] sm:$0xff]
        %v341 = vld [vmem:[%s143 + $0x558] sm:$0xff]
        %v342 = vld [vmem:[%s143 + $0x560] sm:$0xff]
        %v343 = vld [vmem:[%s143 + $0x568] sm:$0xff]
        %v344 = vld [vmem:[%s143 + $0x570] sm:$0xff]
        %v345 = vld [vmem:[%s143 + $0x578] sm:$0xff]
        %v346 = vld [vmem:[%s143 + $0x580] sm:$0xff]
        %v347 = vld [vmem:[%s143 + $0x588] sm:$0xff]
        %v348 = vld [vmem:[%s143 + $0x590] sm:$0xff]
        %v349 = vld [vmem:[%s143 + $0x598] sm:$0xff]
        %v350 = vld [vmem:[%s143 + $0x5a0] sm:$0xff]
        %v351 = vld [vmem:[%s143 + $0x5a8] sm:$0xff]
        %v352 = vld [vmem:[%s143 + $0x5b0] sm:$0xff]
        %v353 = vld [vmem:[%s143 + $0x5b8] sm:$0xff]
        %v354 = vld [vmem:[%s143 + $0x5c0] sm:$0xff]
        %v355 = vld [vmem:[%s143 + $0x5c8] sm:$0xff]
        %v356 = vld [vmem:[%s143 + $0x5d0] sm:$0xff]
        %v357 = vld [vmem:[%s143 + $0x5d8] sm:$0xff]
        %v358 = vld [vmem:[%s143 + $0x5e0] sm:$0xff]
        %v359 = vld [vmem:[%s143 + $0x5e8] sm:$0xff]
        %v360 = vld [vmem:[%s143 + $0x5f0] sm:$0xff]
        %v361 = vld [vmem:[%s143 + $0x5f8] sm:$0xff]
        %v362 = vld [vmem:[%s143 + $0x600] sm:$0xff]
        %v363 = vld [vmem:[%s143 + $0x608] sm:$0xff]
        %v364 = vld [vmem:[%s143 + $0x610] sm:$0xff]
        %v365 = vld [vmem:[%s143 + $0x618] sm:$0xff]
        %v366 = vld [vmem:[%s143 + $0x620] sm:$0xff]
        %v367 = vld [vmem:[%s143 + $0x628] sm:$0xff]
        %v368 = vld [vmem:[%s143 + $0x630] sm:$0xff]
        %v369 = vld [vmem:[%s143 + $0x638] sm:$0xff]
        %v370 = vld [vmem:[%s143 + $0x640] sm:$0xff]
        %v371 = vld [vmem:[%s143 + $0x648] sm:$0xff]
        %v372 = vld [vmem:[%s143 + $0x650] sm:$0xff]
        %v373 = vld [vmem:[%s143 + $0x658] sm:$0xff]
        %v374 = vld [vmem:[%s143 + $0x660] sm:$0xff]
        %v375 = vld [vmem:[%s143 + $0x668] sm:$0xff]
        %v376 = vld [vmem:[%s143 + $0x670] sm:$0xff]
        %v377 = vld [vmem:[%s143 + $0x678] sm:$0xff]
        %v378 = vld [vmem:[%s143 + $0x680] sm:$0xff]
        %v379 = vld [vmem:[%s143 + $0x688] sm:$0xff]
        %v380 = vld [vmem:[%s143 + $0x690] sm:$0xff]
        %v381 = vld [vmem:[%s143 + $0x698] sm:$0xff]
        %v382 = vld [vmem:[%s143 + $0x6a0] sm:$0xff]
        %v383 = vld [vmem:[%s143 + $0x6a8] sm:$0xff]
        %v384 = vld [vmem:[%s143 + $0x6b0] sm:$0xff]
        %v385 = vld [vmem:[%s143 + $0x6b8] sm:$0xff]
        %v386 = vld [vmem:[%s143 + $0x6c0] sm:$0xff]
        %v387 = vld [vmem:[%s143 + $0x6c8] sm:$0xff]
        %v388 = vld [vmem:[%s143 + $0x6d0] sm:$0xff]
        %v389 = vld [vmem:[%s143 + $0x6d8] sm:$0xff]
        %v390 = vld [vmem:[%s143 + $0x6e0] sm:$0xff]
        %v391 = vld [vmem:[%s143 + $0x6e8] sm:$0xff]
        %v392 = vld [vmem:[%s143 + $0x6f0] sm:$0xff]
        %v393 = vld [vmem:[%s143 + $0x6f8] sm:$0xff]
        %v394 = vld [vmem:[%s143 + $0x700] sm:$0xff]
        %v395 = vld [vmem:[%s143 + $0x708] sm:$0xff]
        %v396 = vld [vmem:[%s143 + $0x710] sm:$0xff]
        %v397 = vld [vmem:[%s143 + $0x718] sm:$0xff]
        %v398 = vld [vmem:[%s143 + $0x720] sm:$0xff]
        %v399 = vld [vmem:[%s143 + $0x728] sm:$0xff]
        %v400 = vld [vmem:[%s143 + $0x730] sm:$0xff]
        %v401 = vld [vmem:[%s143 + $0x738] sm:$0xff]
        %v402 = vld [vmem:[%s143 + $0x740] sm:$0xff]
        %v403 = vld [vmem:[%s143 + $0x748] sm:$0xff]
        %v404 = vld [vmem:[%s143 + $0x750] sm:$0xff]
        %v405 = vld [vmem:[%s143 + $0x758] sm:$0xff]
        %v406 = vld [vmem:[%s143 + $0x760] sm:$0xff]
        %v407 = vld [vmem:[%s143 + $0x768] sm:$0xff]
        %v408 = vld [vmem:[%s143 + $0x770] sm:$0xff]
        %v409 = vld [vmem:[%s143 + $0x778] sm:$0xff]
        %v410 = vld [vmem:[%s143 + $0x780] sm:$0xff]
        %v411 = vld [vmem:[%s143 + $0x788] sm:$0xff]
        %v412 = vld [vmem:[%s143 + $0x790] sm:$0xff]
        %v413 = vld [vmem:[%s143 + $0x798] sm:$0xff]
        %v414 = vld [vmem:[%s143 + $0x7a0] sm:$0xff]
        %v415 = vld [vmem:[%s143 + $0x7a8] sm:$0xff]
        %v416 = vld [vmem:[%s143 + $0x7b0] sm:$0xff]
        %v417 = vld [vmem:[%s143 + $0x7b8] sm:$0xff]
        %v418 = vld [vmem:[%s143 + $0x7c0] sm:$0xff]
        %v419 = vld [vmem:[%s143 + $0x7c8] sm:$0xff]
        %v420 = vld [vmem:[%s143 + $0x7d0] sm:$0xff]
        %v421 = vld [vmem:[%s143 + $0x7d8] sm:$0xff]
        %v422 = vld [vmem:[%s143 + $0x7e0] sm:$0xff]
        %v423 = vld [vmem:[%s143 + $0x7e8] sm:$0xff]
        %v424 = vld [vmem:[%s143 + $0x7f0] sm:$0xff]
        %v425 = vld [vmem:[%s143 + $0x7f8] sm:$0xff]
        %v426 = vld [vmem:[%s143 + $0x800] sm:$0xff]
        %v427 = vld [vmem:[%s143 + $0x808] sm:$0xff]
        %v428 = vld [vmem:[%s143 + $0x810] sm:$0xff]
        %v429 = vld [vmem:[%s143 + $0x818] sm:$0xff]
        %v430 = vld [vmem:[%s143 + $0x820] sm:$0xff]
        %v431 = vld [vmem:[%s143 + $0x828] sm:$0xff]
        %v432 = vld [vmem:[%s143 + $0x830] sm:$0xff]
        %v433 = vld [vmem:[%s143 + $0x838] sm:$0xff]
        %v434 = vld [vmem:[%s143 + $0x840] sm:$0xff]
        %v435 = vld [vmem:[%s143 + $0x848] sm:$0xff]
        %v436 = vld [vmem:[%s143 + $0x850] sm:$0xff]
        %v437 = vld [vmem:[%s143 + $0x858] sm:$0xff]
        %v438 = vld [vmem:[%s143 + $0x860] sm:$0xff]
        %v439 = vld [vmem:[%s143 + $0x868] sm:$0xff]
        %v440 = vld [vmem:[%s143 + $0x870] sm:$0xff]
        %v441 = vld [vmem:[%s143 + $0x878] sm:$0xff]
        %v442 = vmax.f32 %v170, 0.0
        %v443 = vmax.f32 %v171, 0.0
        %v444 = vmax.f32 %v172, 0.0
        %v445 = vmax.f32 %v173, 0.0
        %v446 = vmax.f32 %v174, 0.0
        %v447 = vmax.f32 %v175, 0.0
        %v448 = vmax.f32 %v176, 0.0
        %v449 = vmax.f32 %v177, 0.0
        %v450 = vmax.f32 %v178, 0.0
        %v451 = vmax.f32 %v179, 0.0
        %v452 = vmax.f32 %v180, 0.0
        %v453 = vmax.f32 %v181, 0.0
        %v454 = vmax.f32 %v182, 0.0
        %v455 = vmax.f32 %v183, 0.0
        %v456 = vmax.f32 %v184, 0.0
        %v457 = vmax.f32 %v185, 0.0
        %v458 = vmax.f32 %v186, 0.0
        %v459 = vmax.f32 %v187, 0.0
        %v460 = vmax.f32 %v188, 0.0
        %v461 = vmax.f32 %v189, 0.0
        %v462 = vmax.f32 %v190, 0.0
        %v463 = vmax.f32 %v191, 0.0
        %v464 = vmax.f32 %v192, 0.0
        %v465 = vmax.f32 %v193, 0.0
        %v466 = vmax.f32 %v194, 0.0
        %v467 = vmax.f32 %v195, 0.0
        %v468 = vmax.f32 %v196, 0.0
        %v469 = vmax.f32 %v197, 0.0
        %v470 = vmax.f32 %v198, 0.0
        %v471 = vmax.f32 %v199, 0.0
        %v472 = vmax.f32 %v200, 0.0
        %v473 = vmax.f32 %v201, 0.0
        %v474 = vmax.f32 %v202, 0.0
        %v475 = vmax.f32 %v203, 0.0
        %v476 = vmax.f32 %v204, 0.0
        %v477 = vmax.f32 %v205, 0.0
        %v478 = vmax.f32 %v206, 0.0
        %v479 = vmax.f32 %v207, 0.0
        %v480 = vmax.f32 %v208, 0.0
        %v481 = vmax.f32 %v209, 0.0
        %v482 = vmax.f32 %v210, 0.0
        %v483 = vmax.f32 %v211, 0.0
        %v484 = vmax.f32 %v212, 0.0
        %v485 = vmax.f32 %v213, 0.0
        %v486 = vmax.f32 %v214, 0.0
        %v487 = vmax.f32 %v215, 0.0
        %v488 = vmax.f32 %v216, 0.0
        %v489 = vmax.f32 %v217, 0.0
        %v490 = vmax.f32 %v218, 0.0
        %v491 = vmax.f32 %v219, 0.0
        %v492 = vmax.f32 %v220, 0.0
        %v493 = vmax.f32 %v221, 0.0
        %v494 = vmax.f32 %v222, 0.0
        %v495 = vmax.f32 %v223, 0.0
        %v496 = vmax.f32 %v224, 0.0
        %v497 = vmax.f32 %v225, 0.0
        %v498 = vmax.f32 %v226, 0.0
        %v499 = vmax.f32 %v227, 0.0
        %v500 = vmax.f32 %v228, 0.0
        %v501 = vmax.f32 %v229, 0.0
        %v502 = vmax.f32 %v230, 0.0
        %v503 = vmax.f32 %v231, 0.0
        %v504 = vmax.f32 %v232, 0.0
        %v505 = vmax.f32 %v233, 0.0
        %v506 = vmax.f32 %v234, 0.0
        %v507 = vmax.f32 %v235, 0.0
        %v508 = vmax.f32 %v236, 0.0
        %v509 = vmax.f32 %v237, 0.0
        %v510 = vmax.f32 %v238, 0.0
        %v511 = vmax.f32 %v239, 0.0
        %v512 = vmax.f32 %v240, 0.0
        %v513 = vmax.f32 %v241, 0.0
        %v514 = vmax.f32 %v242, 0.0
        %v515 = vmax.f32 %v243, 0.0
        %v516 = vmax.f32 %v244, 0.0
        %v517 = vmax.f32 %v245, 0.0
        %v518 = vmax.f32 %v246, 0.0
        %v519 = vmax.f32 %v247, 0.0
        %v520 = vmax.f32 %v248, 0.0
        %v521 = vmax.f32 %v249, 0.0
        %v522 = vmax.f32 %v250, 0.0
        %v523 = vmax.f32 %v251, 0.0
        %v524 = vmax.f32 %v252, 0.0
        %v525 = vmax.f32 %v253, 0.0
        %v526 = vmax.f32 %v254, 0.0
        %v527 = vmax.f32 %v255, 0.0
        %v528 = vmax.f32 %v256, 0.0
        %v529 = vmax.f32 %v257, 0.0
        %v530 = vmax.f32 %v258, 0.0
        %v531 = vmax.f32 %v259, 0.0
        %v532 = vmax.f32 %v260, 0.0
        %v533 = vmax.f32 %v261, 0.0
        %v534 = vmax.f32 %v262, 0.0
        %v535 = vmax.f32 %v263, 0.0
        %v536 = vmax.f32 %v264, 0.0
        %v537 = vmax.f32 %v265, 0.0
        %v538 = vmax.f32 %v266, 0.0
        %v539 = vmax.f32 %v267, 0.0
        %v540 = vmax.f32 %v268, 0.0
        %v541 = vmax.f32 %v269, 0.0
        %v542 = vmax.f32 %v270, 0.0
        %v543 = vmax.f32 %v271, 0.0
        %v544 = vmax.f32 %v272, 0.0
        %v545 = vmax.f32 %v273, 0.0
        %v546 = vmax.f32 %v274, 0.0
        %v547 = vmax.f32 %v275, 0.0
        %v548 = vmax.f32 %v276, 0.0
        %v549 = vmax.f32 %v277, 0.0
        %v550 = vmax.f32 %v278, 0.0
        %v551 = vmax.f32 %v279, 0.0
        %v552 = vmax.f32 %v280, 0.0
        %v553 = vmax.f32 %v281, 0.0
        %v554 = vmax.f32 %v282, 0.0
        %v555 = vmax.f32 %v283, 0.0
        %v556 = vmax.f32 %v284, 0.0
        %v557 = vmax.f32 %v285, 0.0
        %v558 = vmax.f32 %v286, 0.0
        %v559 = vmax.f32 %v287, 0.0
        %v560 = vmax.f32 %v288, 0.0
        %v561 = vmax.f32 %v289, 0.0
        %v562 = vmax.f32 %v290, 0.0
        %v563 = vmax.f32 %v291, 0.0
        %v564 = vmax.f32 %v292, 0.0
        %v565 = vmax.f32 %v293, 0.0
        %v566 = vmax.f32 %v294, 0.0
        %v567 = vmax.f32 %v295, 0.0
        %v568 = vmax.f32 %v296, 0.0
        %v569 = vmax.f32 %v297, 0.0
        %v570 = vmax.f32 %v298, 0.0
        %v571 = vmax.f32 %v299, 0.0
        %v572 = vmax.f32 %v300, 0.0
        %v573 = vmax.f32 %v301, 0.0
        %v574 = vmax.f32 %v302, 0.0
        %v575 = vmax.f32 %v303, 0.0
        %v576 = vmax.f32 %v304, 0.0
        %v577 = vmax.f32 %v305, 0.0
        %v578 = vmax.f32 %v306, 0.0
        %v579 = vmax.f32 %v307, 0.0
        %v580 = vmax.f32 %v308, 0.0
        %v581 = vmax.f32 %v309, 0.0
        %v582 = vmax.f32 %v310, 0.0
        %v583 = vmax.f32 %v311, 0.0
        %v584 = vmax.f32 %v312, 0.0
        %v585 = vmax.f32 %v313, 0.0
        %v586 = vmax.f32 %v314, 0.0
        %v587 = vmax.f32 %v315, 0.0
        %v588 = vmax.f32 %v316, 0.0
        %v589 = vmax.f32 %v317, 0.0
        %v590 = vmax.f32 %v318, 0.0
        %v591 = vmax.f32 %v319, 0.0
        %v592 = vmax.f32 %v320, 0.0
        %v593 = vmax.f32 %v321, 0.0
        %v594 = vmax.f32 %v322, 0.0
        %v595 = vmax.f32 %v323, 0.0
        %v596 = vmax.f32 %v324, 0.0
        %v597 = vmax.f32 %v325, 0.0
        %v598 = vmax.f32 %v326, 0.0
        %v599 = vmax.f32 %v327, 0.0
        %v600 = vmax.f32 %v328, 0.0
        %v601 = vmax.f32 %v329, 0.0
        %v602 = vmax.f32 %v330, 0.0
        %v603 = vmax.f32 %v331, 0.0
        %v604 = vmax.f32 %v332, 0.0
        %v605 = vmax.f32 %v333, 0.0
        %v606 = vmax.f32 %v334, 0.0
        %v607 = vmax.f32 %v335, 0.0
        %v608 = vmax.f32 %v336, 0.0
        %v609 = vmax.f32 %v337, 0.0
        %v610 = vmax.f32 %v338, 0.0
        %v611 = vmax.f32 %v339, 0.0
        %v612 = vmax.f32 %v340, 0.0
        %v613 = vmax.f32 %v341, 0.0
        %v614 = vmax.f32 %v342, 0.0
        %v615 = vmax.f32 %v343, 0.0
        %v616 = vmax.f32 %v344, 0.0
        %v617 = vmax.f32 %v345, 0.0
        %v618 = vmax.f32 %v346, 0.0
        %v619 = vmax.f32 %v347, 0.0
        %v620 = vmax.f32 %v348, 0.0
        %v621 = vmax.f32 %v349, 0.0
        %v622 = vmax.f32 %v350, 0.0
        %v623 = vmax.f32 %v351, 0.0
        %v624 = vmax.f32 %v352, 0.0
        %v625 = vmax.f32 %v353, 0.0
        %v626 = vmax.f32 %v354, 0.0
        %v627 = vmax.f32 %v355, 0.0
        %v628 = vmax.f32 %v356, 0.0
        %v629 = vmax.f32 %v357, 0.0
        %v630 = vmax.f32 %v358, 0.0
        %v631 = vmax.f32 %v359, 0.0
        %v632 = vmax.f32 %v360, 0.0
        %v633 = vmax.f32 %v361, 0.0
        %v634 = vmax.f32 %v362, 0.0
        %v635 = vmax.f32 %v363, 0.0
        %v636 = vmax.f32 %v364, 0.0
        %v637 = vmax.f32 %v365, 0.0
        %v638 = vmax.f32 %v366, 0.0
        %v639 = vmax.f32 %v367, 0.0
        %v640 = vmax.f32 %v368, 0.0
        %v641 = vmax.f32 %v369, 0.0
        %v642 = vmax.f32 %v370, 0.0
        %v643 = vmax.f32 %v371, 0.0
        %v644 = vmax.f32 %v372, 0.0
        %v645 = vmax.f32 %v373, 0.0
        %v646 = vmax.f32 %v374, 0.0
        %v647 = vmax.f32 %v375, 0.0
        %v648 = vmax.f32 %v376, 0.0
        %v649 = vmax.f32 %v377, 0.0
        %v650 = vmax.f32 %v378, 0.0
        %v651 = vmax.f32 %v379, 0.0
        %v652 = vmax.f32 %v380, 0.0
        %v653 = vmax.f32 %v381, 0.0
        %v654 = vmax.f32 %v382, 0.0
        %v655 = vmax.f32 %v383, 0.0
        %v656 = vmax.f32 %v384, 0.0
        %v657 = vmax.f32 %v385, 0.0
        %v658 = vmax.f32 %v386, 0.0
        %v659 = vmax.f32 %v387, 0.0
        %v660 = vmax.f32 %v388, 0.0
        %v661 = vmax.f32 %v389, 0.0
        %v662 = vmax.f32 %v390, 0.0
        %v663 = vmax.f32 %v391, 0.0
        %v664 = vmax.f32 %v392, 0.0
        %v665 = vmax.f32 %v393, 0.0
        %v666 = vmax.f32 %v394, 0.0
        %v667 = vmax.f32 %v395, 0.0
        %v668 = vmax.f32 %v396, 0.0
        %v669 = vmax.f32 %v397, 0.0
        %v670 = vmax.f32 %v398, 0.0
        %v671 = vmax.f32 %v399, 0.0
        %v672 = vmax.f32 %v400, 0.0
        %v673 = vmax.f32 %v401, 0.0
        %v674 = vmax.f32 %v402, 0.0
        %v675 = vmax.f32 %v403, 0.0
        %v676 = vmax.f32 %v404, 0.0
        %v677 = vmax.f32 %v405, 0.0
        %v678 = vmax.f32 %v406, 0.0
        %v679 = vmax.f32 %v407, 0.0
        %v680 = vmax.f32 %v408, 0.0
        %v681 = vmax.f32 %v409, 0.0
        %v682 = vmax.f32 %v410, 0.0
        %v683 = vmax.f32 %v411, 0.0
        %v684 = vmax.f32 %v412, 0.0
        %v685 = vmax.f32 %v413, 0.0
        %v686 = vmax.f32 %v414, 0.0
        %v687 = vmax.f32 %v415, 0.0
        %v688 = vmax.f32 %v416, 0.0
        %v689 = vmax.f32 %v417, 0.0
        %v690 = vmax.f32 %v418, 0.0
        %v691 = vmax.f32 %v419, 0.0
        %v692 = vmax.f32 %v420, 0.0
        %v693 = vmax.f32 %v421, 0.0
        %v694 = vmax.f32 %v422, 0.0
        %v695 = vmax.f32 %v423, 0.0
        %v696 = vmax.f32 %v424, 0.0
        %v697 = vmax.f32 %v425, 0.0
        %v698 = vmax.f32 %v426, 0.0
        %v699 = vmax.f32 %v427, 0.0
        %v700 = vmax.f32 %v428, 0.0
        %v701 = vmax.f32 %v429, 0.0
        %v702 = vmax.f32 %v430, 0.0
        %v703 = vmax.f32 %v431, 0.0
        %v704 = vmax.f32 %v432, 0.0
        %v705 = vmax.f32 %v433, 0.0
        %v706 = vmax.f32 %v434, 0.0
        %v707 = vmax.f32 %v435, 0.0
        %v708 = vmax.f32 %v436, 0.0
        %v709 = vmax.f32 %v437, 0.0
        %v710 = vmax.f32 %v438, 0.0
        %v711 = vmax.f32 %v439, 0.0
        %v712 = vmax.f32 %v440, 0.0
        %v713 = vmax.f32 %v441, 0.0
        %v714 = vstv %s169
        %v715 = vmul.f32 %v442, %v714
        %v716 = vmul.f32 %v443, %v714
        %v717 = vmul.f32 %v444, %v714
        %v718 = vmul.f32 %v445, %v714
        %v719 = vmul.f32 %v446, %v714
        %v720 = vmul.f32 %v447, %v714
        %v721 = vmul.f32 %v448, %v714
        %v722 = vmul.f32 %v449, %v714
        %v723 = vmul.f32 %v450, %v714
        %v724 = vmul.f32 %v451, %v714
        %v725 = vmul.f32 %v452, %v714
        %v726 = vmul.f32 %v453, %v714
        %v727 = vmul.f32 %v454, %v714
        %v728 = vmul.f32 %v455, %v714
        %v729 = vmul.f32 %v456, %v714
        %v730 = vmul.f32 %v457, %v714
        %v731 = vmul.f32 %v458, %v714
        %v732 = vmul.f32 %v459, %v714
        %v733 = vmul.f32 %v460, %v714
        %v734 = vmul.f32 %v461, %v714
        %v735 = vmul.f32 %v462, %v714
        %v736 = vmul.f32 %v463, %v714
        %v737 = vmul.f32 %v464, %v714
        %v738 = vmul.f32 %v465, %v714
        %v739 = vmul.f32 %v466, %v714
        %v740 = vmul.f32 %v467, %v714
        %v741 = vmul.f32 %v468, %v714
        %v742 = vmul.f32 %v469, %v714
        %v743 = vmul.f32 %v470, %v714
        %v744 = vmul.f32 %v471, %v714
        %v745 = vmul.f32 %v472, %v714
        %v746 = vmul.f32 %v473, %v714
        %v747 = vmul.f32 %v474, %v714
        %v748 = vmul.f32 %v475, %v714
        %v749 = vmul.f32 %v476, %v714
        %v750 = vmul.f32 %v477, %v714
        %v751 = vmul.f32 %v478, %v714
        %v752 = vmul.f32 %v479, %v714
        %v753 = vmul.f32 %v480, %v714
        %v754 = vmul.f32 %v481, %v714
        %v755 = vmul.f32 %v482, %v714
        %v756 = vmul.f32 %v483, %v714
        %v757 = vmul.f32 %v484, %v714
        %v758 = vmul.f32 %v485, %v714
        %v759 = vmul.f32 %v486, %v714
        %v760 = vmul.f32 %v487, %v714
        %v761 = vmul.f32 %v488, %v714
        %v762 = vmul.f32 %v489, %v714
        %v763 = vmul.f32 %v490, %v714
        %v764 = vmul.f32 %v491, %v714
        %v765 = vmul.f32 %v492, %v714
        %v766 = vmul.f32 %v493, %v714
        %v767 = vmul.f32 %v494, %v714
        %v768 = vmul.f32 %v495, %v714
        %v769 = vmul.f32 %v496, %v714
        %v770 = vmul.f32 %v497, %v714
        %v771 = vmul.f32 %v498, %v714
        %v772 = vmul.f32 %v499, %v714
        %v773 = vmul.f32 %v500, %v714
        %v774 = vmul.f32 %v501, %v714
        %v775 = vmul.f32 %v502, %v714
        %v776 = vmul.f32 %v503, %v714
        %v777 = vmul.f32 %v504, %v714
        %v778 = vmul.f32 %v505, %v714
        %v779 = vmul.f32 %v506, %v714
        %v780 = vmul.f32 %v507, %v714
        %v781 = vmul.f32 %v508, %v714
        %v782 = vmul.f32 %v509, %v714
        %v783 = vmul.f32 %v510, %v714
        %v784 = vmul.f32 %v511, %v714
        %v785 = vmul.f32 %v512, %v714
        %v786 = vmul.f32 %v513, %v714
        %v787 = vmul.f32 %v514, %v714
        %v788 = vmul.f32 %v515, %v714
        %v789 = vmul.f32 %v516, %v714
        %v790 = vmul.f32 %v517, %v714
        %v791 = vmul.f32 %v518, %v714
        %v792 = vmul.f32 %v519, %v714
        %v793 = vmul.f32 %v520, %v714
        %v794 = vmul.f32 %v521, %v714
        %v795 = vmul.f32 %v522, %v714
        %v796 = vmul.f32 %v523, %v714
        %v797 = vmul.f32 %v524, %v714
        %v798 = vmul.f32 %v525, %v714
        %v799 = vmul.f32 %v526, %v714
        %v800 = vmul.f32 %v527, %v714
        %v801 = vmul.f32 %v528, %v714
        %v802 = vmul.f32 %v529, %v714
        %v803 = vmul.f32 %v530, %v714
        %v804 = vmul.f32 %v531, %v714
        %v805 = vmul.f32 %v532, %v714
        %v806 = vmul.f32 %v533, %v714
        %v807 = vmul.f32 %v534, %v714
        %v808 = vmul.f32 %v535, %v714
        %v809 = vmul.f32 %v536, %v714
        %v810 = vmul.f32 %v537, %v714
        %v811 = vmul.f32 %v538, %v714
        %v812 = vmul.f32 %v539, %v714
        %v813 = vmul.f32 %v540, %v714
        %v814 = vmul.f32 %v541, %v714
        %v815 = vmul.f32 %v542, %v714
        %v816 = vmul.f32 %v543, %v714
        %v817 = vmul.f32 %v544, %v714
        %v818 = vmul.f32 %v545, %v714
        %v819 = vmul.f32 %v546, %v714
        %v820 = vmul.f32 %v547, %v714
        %v821 = vmul.f32 %v548, %v714
        %v822 = vmul.f32 %v549, %v714
        %v823 = vmul.f32 %v550, %v714
        %v824 = vmul.f32 %v551, %v714
        %v825 = vmul.f32 %v552, %v714
        %v826 = vmul.f32 %v553, %v714
        %v827 = vmul.f32 %v554, %v714
        %v828 = vmul.f32 %v555, %v714
        %v829 = vmul.f32 %v556, %v714
        %v830 = vmul.f32 %v557, %v714
        %v831 = vmul.f32 %v558, %v714
        %v832 = vmul.f32 %v559, %v714
        %v833 = vmul.f32 %v560, %v714
        %v834 = vmul.f32 %v561, %v714
        %v835 = vmul.f32 %v562, %v714
        %v836 = vmul.f32 %v563, %v714
        %v837 = vmul.f32 %v564, %v714
        %v838 = vmul.f32 %v565, %v714
        %v839 = vmul.f32 %v566, %v714
        %v840 = vmul.f32 %v567, %v714
        %v841 = vmul.f32 %v568, %v714
        %v842 = vmul.f32 %v569, %v714
        %v843 = vmul.f32 %v570, %v714
        %v844 = vmul.f32 %v571, %v714
        %v845 = vmul.f32 %v572, %v714
        %v846 = vmul.f32 %v573, %v714
        %v847 = vmul.f32 %v574, %v714
        %v848 = vmul.f32 %v575, %v714
        %v849 = vmul.f32 %v576, %v714
        %v850 = vmul.f32 %v577, %v714
        %v851 = vmul.f32 %v578, %v714
        %v852 = vmul.f32 %v579, %v714
        %v853 = vmul.f32 %v580, %v714
        %v854 = vmul.f32 %v581, %v714
        %v855 = vmul.f32 %v582, %v714
        %v856 = vmul.f32 %v583, %v714
        %v857 = vmul.f32 %v584, %v714
        %v858 = vmul.f32 %v585, %v714
        %v859 = vmul.f32 %v586, %v714
        %v860 = vmul.f32 %v587, %v714
        %v861 = vmul.f32 %v588, %v714
        %v862 = vmul.f32 %v589, %v714
        %v863 = vmul.f32 %v590, %v714
        %v864 = vmul.f32 %v591, %v714
        %v865 = vmul.f32 %v592, %v714
        %v866 = vmul.f32 %v593, %v714
        %v867 = vmul.f32 %v594, %v714
        %v868 = vmul.f32 %v595, %v714
        %v869 = vmul.f32 %v596, %v714
        %v870 = vmul.f32 %v597, %v714
        %v871 = vmul.f32 %v598, %v714
        %v872 = vmul.f32 %v599, %v714
        %v873 = vmul.f32 %v600, %v714
        %v874 = vmul.f32 %v601, %v714
        %v875 = vmul.f32 %v602, %v714
        %v876 = vmul.f32 %v603, %v714
        %v877 = vmul.f32 %v604, %v714
        %v878 = vmul.f32 %v605, %v714
        %v879 = vmul.f32 %v606, %v714
        %v880 = vmul.f32 %v607, %v714
        %v881 = vmul.f32 %v608, %v714
        %v882 = vmul.f32 %v609, %v714
        %v883 = vmul.f32 %v610, %v714
        %v884 = vmul.f32 %v611, %v714
        %v885 = vmul.f32 %v612, %v714
        %v886 = vmul.f32 %v613, %v714
        %v887 = vmul.f32 %v614, %v714
        %v888 = vmul.f32 %v615, %v714
        %v889 = vmul.f32 %v616, %v714
        %v890 = vmul.f32 %v617, %v714
        %v891 = vmul.f32 %v618, %v714
        %v892 = vmul.f32 %v619, %v714
        %v893 = vmul.f32 %v620, %v714
        %v894 = vmul.f32 %v621, %v714
        %v895 = vmul.f32 %v622, %v714
        %v896 = vmul.f32 %v623, %v714
        %v897 = vmul.f32 %v624, %v714
        %v898 = vmul.f32 %v625, %v714
        %v899 = vmul.f32 %v626, %v714
        %v900 = vmul.f32 %v627, %v714
        %v901 = vmul.f32 %v628, %v714
        %v902 = vmul.f32 %v629, %v714
        %v903 = vmul.f32 %v630, %v714
        %v904 = vmul.f32 %v631, %v714
        %v905 = vmul.f32 %v632, %v714
        %v906 = vmul.f32 %v633, %v714
        %v907 = vmul.f32 %v634, %v714
        %v908 = vmul.f32 %v635, %v714
        %v909 = vmul.f32 %v636, %v714
        %v910 = vmul.f32 %v637, %v714
        %v911 = vmul.f32 %v638, %v714
        %v912 = vmul.f32 %v639, %v714
        %v913 = vmul.f32 %v640, %v714
        %v914 = vmul.f32 %v641, %v714
        %v915 = vmul.f32 %v642, %v714
        %v916 = vmul.f32 %v643, %v714
        %v917 = vmul.f32 %v644, %v714
        %v918 = vmul.f32 %v645, %v714
        %v919 = vmul.f32 %v646, %v714
        %v920 = vmul.f32 %v647, %v714
        %v921 = vmul.f32 %v648, %v714
        %v922 = vmul.f32 %v649, %v714
        %v923 = vmul.f32 %v650, %v714
        %v924 = vmul.f32 %v651, %v714
        %v925 = vmul.f32 %v652, %v714
        %v926 = vmul.f32 %v653, %v714
        %v927 = vmul.f32 %v654, %v714
        %v928 = vmul.f32 %v655, %v714
        %v929 = vmul.f32 %v656, %v714
        %v930 = vmul.f32 %v657, %v714
        %v931 = vmul.f32 %v658, %v714
        %v932 = vmul.f32 %v659, %v714
        %v933 = vmul.f32 %v660, %v714
        %v934 = vmul.f32 %v661, %v714
        %v935 = vmul.f32 %v662, %v714
        %v936 = vmul.f32 %v663, %v714
        %v937 = vmul.f32 %v664, %v714
        %v938 = vmul.f32 %v665, %v714
        %v939 = vmul.f32 %v666, %v714
        %v940 = vmul.f32 %v667, %v714
        %v941 = vmul.f32 %v668, %v714
        %v942 = vmul.f32 %v669, %v714
        %v943 = vmul.f32 %v670, %v714
        %v944 = vmul.f32 %v671, %v714
        %v945 = vmul.f32 %v672, %v714
        %v946 = vmul.f32 %v673, %v714
        %v947 = vmul.f32 %v674, %v714
        %v948 = vmul.f32 %v675, %v714
        %v949 = vmul.f32 %v676, %v714
        %v950 = vmul.f32 %v677, %v714
        %v951 = vmul.f32 %v678, %v714
        %v952 = vmul.f32 %v679, %v714
        %v953 = vmul.f32 %v680, %v714
        %v954 = vmul.f32 %v681, %v714
        %v955 = vmul.f32 %v682, %v714
        %v956 = vmul.f32 %v683, %v714
        %v957 = vmul.f32 %v684, %v714
        %v958 = vmul.f32 %v685, %v714
        %v959 = vmul.f32 %v686, %v714
        %v960 = vmul.f32 %v687, %v714
        %v961 = vmul.f32 %v688, %v714
        %v962 = vmul.f32 %v689, %v714
        %v963 = vmul.f32 %v690, %v714
        %v964 = vmul.f32 %v691, %v714
        %v965 = vmul.f32 %v692, %v714
        %v966 = vmul.f32 %v693, %v714
        %v967 = vmul.f32 %v694, %v714
        %v968 = vmul.f32 %v695, %v714
        %v969 = vmul.f32 %v696, %v714
        %v970 = vmul.f32 %v697, %v714
        %v971 = vmul.f32 %v698, %v714
        %v972 = vmul.f32 %v699, %v714
        %v973 = vmul.f32 %v700, %v714
        %v974 = vmul.f32 %v701, %v714
        %v975 = vmul.f32 %v702, %v714
        %v976 = vmul.f32 %v703, %v714
        %v977 = vmul.f32 %v704, %v714
        %v978 = vmul.f32 %v705, %v714
        %v979 = vmul.f32 %v706, %v714
        %v980 = vmul.f32 %v707, %v714
        %v981 = vmul.f32 %v708, %v714
        %v982 = vmul.f32 %v709, %v714
        %v983 = vmul.f32 %v710, %v714
        %v984 = vmul.f32 %v711, %v714
        %v985 = vmul.f32 %v712, %v714
        %v986 = vmul.f32 %v713, %v714
        %v987 = vround.ne.pseudo %v715
        %v988 = vround.ne.pseudo %v716
        %v989 = vround.ne.pseudo %v717
        %v990 = vround.ne.pseudo %v718
        %v991 = vround.ne.pseudo %v719
        %v992 = vround.ne.pseudo %v720
        %v993 = vround.ne.pseudo %v721
        %v994 = vround.ne.pseudo %v722
        %v995 = vround.ne.pseudo %v723
        %v996 = vround.ne.pseudo %v724
        %v997 = vround.ne.pseudo %v725
        %v998 = vround.ne.pseudo %v726
        %v999 = vround.ne.pseudo %v727
        %v1000 = vround.ne.pseudo %v728
        %v1001 = vround.ne.pseudo %v729
        %v1002 = vround.ne.pseudo %v730
        %v1003 = vround.ne.pseudo %v731
        %v1004 = vround.ne.pseudo %v732
        %v1005 = vround.ne.pseudo %v733
        %v1006 = vround.ne.pseudo %v734
        %v1007 = vround.ne.pseudo %v735
        %v1008 = vround.ne.pseudo %v736
        %v1009 = vround.ne.pseudo %v737
        %v1010 = vround.ne.pseudo %v738
        %v1011 = vround.ne.pseudo %v739
        %v1012 = vround.ne.pseudo %v740
        %v1013 = vround.ne.pseudo %v741
        %v1014 = vround.ne.pseudo %v742
        %v1015 = vround.ne.pseudo %v743
        %v1016 = vround.ne.pseudo %v744
        %v1017 = vround.ne.pseudo %v745
        %v1018 = vround.ne.pseudo %v746
        %v1019 = vround.ne.pseudo %v747
        %v1020 = vround.ne.pseudo %v748
        %v1021 = vround.ne.pseudo %v749
        %v1022 = vround.ne.pseudo %v750
        %v1023 = vround.ne.pseudo %v751
        %v1024 = vround.ne.pseudo %v752
        %v1025 = vround.ne.pseudo %v753
        %v1026 = vround.ne.pseudo %v754
        %v1027 = vround.ne.pseudo %v755
        %v1028 = vround.ne.pseudo %v756
        %v1029 = vround.ne.pseudo %v757
        %v1030 = vround.ne.pseudo %v758
        %v1031 = vround.ne.pseudo %v759
        %v1032 = vround.ne.pseudo %v760
        %v1033 = vround.ne.pseudo %v761
        %v1034 = vround.ne.pseudo %v762
        %v1035 = vround.ne.pseudo %v763
        %v1036 = vround.ne.pseudo %v764
        %v1037 = vround.ne.pseudo %v765
        %v1038 = vround.ne.pseudo %v766
        %v1039 = vround.ne.pseudo %v767
        %v1040 = vround.ne.pseudo %v768
        %v1041 = vround.ne.pseudo %v769
        %v1042 = vround.ne.pseudo %v770
        %v1043 = vround.ne.pseudo %v771
        %v1044 = vround.ne.pseudo %v772
        %v1045 = vround.ne.pseudo %v773
        %v1046 = vround.ne.pseudo %v774
        %v1047 = vround.ne.pseudo %v775
        %v1048 = vround.ne.pseudo %v776
        %v1049 = vround.ne.pseudo %v777
        %v1050 = vround.ne.pseudo %v778
        %v1051 = vround.ne.pseudo %v779
        %v1052 = vround.ne.pseudo %v780
        %v1053 = vround.ne.pseudo %v781
        %v1054 = vround.ne.pseudo %v782
        %v1055 = vround.ne.pseudo %v783
        %v1056 = vround.ne.pseudo %v784
        %v1057 = vround.ne.pseudo %v785
        %v1058 = vround.ne.pseudo %v786
        %v1059 = vround.ne.pseudo %v787
        %v1060 = vround.ne.pseudo %v788
        %v1061 = vround.ne.pseudo %v789
        %v1062 = vround.ne.pseudo %v790
        %v1063 = vround.ne.pseudo %v791
        %v1064 = vround.ne.pseudo %v792
        %v1065 = vround.ne.pseudo %v793
        %v1066 = vround.ne.pseudo %v794
        %v1067 = vround.ne.pseudo %v795
        %v1068 = vround.ne.pseudo %v796
        %v1069 = vround.ne.pseudo %v797
        %v1070 = vround.ne.pseudo %v798
        %v1071 = vround.ne.pseudo %v799
        %v1072 = vround.ne.pseudo %v800
        %v1073 = vround.ne.pseudo %v801
        %v1074 = vround.ne.pseudo %v802
        %v1075 = vround.ne.pseudo %v803
        %v1076 = vround.ne.pseudo %v804
        %v1077 = vround.ne.pseudo %v805
        %v1078 = vround.ne.pseudo %v806
        %v1079 = vround.ne.pseudo %v807
        %v1080 = vround.ne.pseudo %v808
        %v1081 = vround.ne.pseudo %v809
        %v1082 = vround.ne.pseudo %v810
        %v1083 = vround.ne.pseudo %v811
        %v1084 = vround.ne.pseudo %v812
        %v1085 = vround.ne.pseudo %v813
        %v1086 = vround.ne.pseudo %v814
        %v1087 = vround.ne.pseudo %v815
        %v1088 = vround.ne.pseudo %v816
        %v1089 = vround.ne.pseudo %v817
        %v1090 = vround.ne.pseudo %v818
        %v1091 = vround.ne.pseudo %v819
        %v1092 = vround.ne.pseudo %v820
        %v1093 = vround.ne.pseudo %v821
        %v1094 = vround.ne.pseudo %v822
        %v1095 = vround.ne.pseudo %v823
        %v1096 = vround.ne.pseudo %v824
        %v1097 = vround.ne.pseudo %v825
        %v1098 = vround.ne.pseudo %v826
        %v1099 = vround.ne.pseudo %v827
        %v1100 = vround.ne.pseudo %v828
        %v1101 = vround.ne.pseudo %v829
        %v1102 = vround.ne.pseudo %v830
        %v1103 = vround.ne.pseudo %v831
        %v1104 = vround.ne.pseudo %v832
        %v1105 = vround.ne.pseudo %v833
        %v1106 = vround.ne.pseudo %v834
        %v1107 = vround.ne.pseudo %v835
        %v1108 = vround.ne.pseudo %v836
        %v1109 = vround.ne.pseudo %v837
        %v1110 = vround.ne.pseudo %v838
        %v1111 = vround.ne.pseudo %v839
        %v1112 = vround.ne.pseudo %v840
        %v1113 = vround.ne.pseudo %v841
        %v1114 = vround.ne.pseudo %v842
        %v1115 = vround.ne.pseudo %v843
        %v1116 = vround.ne.pseudo %v844
        %v1117 = vround.ne.pseudo %v845
        %v1118 = vround.ne.pseudo %v846
        %v1119 = vround.ne.pseudo %v847
        %v1120 = vround.ne.pseudo %v848
        %v1121 = vround.ne.pseudo %v849
        %v1122 = vround.ne.pseudo %v850
        %v1123 = vround.ne.pseudo %v851
        %v1124 = vround.ne.pseudo %v852
        %v1125 = vround.ne.pseudo %v853
        %v1126 = vround.ne.pseudo %v854
        %v1127 = vround.ne.pseudo %v855
        %v1128 = vround.ne.pseudo %v856
        %v1129 = vround.ne.pseudo %v857
        %v1130 = vround.ne.pseudo %v858
        %v1131 = vround.ne.pseudo %v859
        %v1132 = vround.ne.pseudo %v860
        %v1133 = vround.ne.pseudo %v861
        %v1134 = vround.ne.pseudo %v862
        %v1135 = vround.ne.pseudo %v863
        %v1136 = vround.ne.pseudo %v864
        %v1137 = vround.ne.pseudo %v865
        %v1138 = vround.ne.pseudo %v866
        %v1139 = vround.ne.pseudo %v867
        %v1140 = vround.ne.pseudo %v868
        %v1141 = vround.ne.pseudo %v869
        %v1142 = vround.ne.pseudo %v870
        %v1143 = vround.ne.pseudo %v871
        %v1144 = vround.ne.pseudo %v872
        %v1145 = vround.ne.pseudo %v873
        %v1146 = vround.ne.pseudo %v874
        %v1147 = vround.ne.pseudo %v875
        %v1148 = vround.ne.pseudo %v876
        %v1149 = vround.ne.pseudo %v877
        %v1150 = vround.ne.pseudo %v878
        %v1151 = vround.ne.pseudo %v879
        %v1152 = vround.ne.pseudo %v880
        %v1153 = vround.ne.pseudo %v881
        %v1154 = vround.ne.pseudo %v882
        %v1155 = vround.ne.pseudo %v883
        %v1156 = vround.ne.pseudo %v884
        %v1157 = vround.ne.pseudo %v885
        %v1158 = vround.ne.pseudo %v886
        %v1159 = vround.ne.pseudo %v887
        %v1160 = vround.ne.pseudo %v888
        %v1161 = vround.ne.pseudo %v889
        %v1162 = vround.ne.pseudo %v890
        %v1163 = vround.ne.pseudo %v891
        %v1164 = vround.ne.pseudo %v892
        %v1165 = vround.ne.pseudo %v893
        %v1166 = vround.ne.pseudo %v894
        %v1167 = vround.ne.pseudo %v895
        %v1168 = vround.ne.pseudo %v896
        %v1169 = vround.ne.pseudo %v897
        %v1170 = vround.ne.pseudo %v898
        %v1171 = vround.ne.pseudo %v899
        %v1172 = vround.ne.pseudo %v900
        %v1173 = vround.ne.pseudo %v901
        %v1174 = vround.ne.pseudo %v902
        %v1175 = vround.ne.pseudo %v903
        %v1176 = vround.ne.pseudo %v904
        %v1177 = vround.ne.pseudo %v905
        %v1178 = vround.ne.pseudo %v906
        %v1179 = vround.ne.pseudo %v907
        %v1180 = vround.ne.pseudo %v908
        %v1181 = vround.ne.pseudo %v909
        %v1182 = vround.ne.pseudo %v910
        %v1183 = vround.ne.pseudo %v911
        %v1184 = vround.ne.pseudo %v912
        %v1185 = vround.ne.pseudo %v913
        %v1186 = vround.ne.pseudo %v914
        %v1187 = vround.ne.pseudo %v915
        %v1188 = vround.ne.pseudo %v916
        %v1189 = vround.ne.pseudo %v917
        %v1190 = vround.ne.pseudo %v918
        %v1191 = vround.ne.pseudo %v919
        %v1192 = vround.ne.pseudo %v920
        %v1193 = vround.ne.pseudo %v921
        %v1194 = vround.ne.pseudo %v922
        %v1195 = vround.ne.pseudo %v923
        %v1196 = vround.ne.pseudo %v924
        %v1197 = vround.ne.pseudo %v925
        %v1198 = vround.ne.pseudo %v926
        %v1199 = vround.ne.pseudo %v927
        %v1200 = vround.ne.pseudo %v928
        %v1201 = vround.ne.pseudo %v929
        %v1202 = vround.ne.pseudo %v930
        %v1203 = vround.ne.pseudo %v931
        %v1204 = vround.ne.pseudo %v932
        %v1205 = vround.ne.pseudo %v933
        %v1206 = vround.ne.pseudo %v934
        %v1207 = vround.ne.pseudo %v935
        %v1208 = vround.ne.pseudo %v936
        %v1209 = vround.ne.pseudo %v937
        %v1210 = vround.ne.pseudo %v938
        %v1211 = vround.ne.pseudo %v939
        %v1212 = vround.ne.pseudo %v940
        %v1213 = vround.ne.pseudo %v941
        %v1214 = vround.ne.pseudo %v942
        %v1215 = vround.ne.pseudo %v943
        %v1216 = vround.ne.pseudo %v944
        %v1217 = vround.ne.pseudo %v945
        %v1218 = vround.ne.pseudo %v946
        %v1219 = vround.ne.pseudo %v947
        %v1220 = vround.ne.pseudo %v948
        %v1221 = vround.ne.pseudo %v949
        %v1222 = vround.ne.pseudo %v950
        %v1223 = vround.ne.pseudo %v951
        %v1224 = vround.ne.pseudo %v952
        %v1225 = vround.ne.pseudo %v953
        %v1226 = vround.ne.pseudo %v954
        %v1227 = vround.ne.pseudo %v955
        %v1228 = vround.ne.pseudo %v956
        %v1229 = vround.ne.pseudo %v957
        %v1230 = vround.ne.pseudo %v958
        %v1231 = vround.ne.pseudo %v959
        %v1232 = vround.ne.pseudo %v960
        %v1233 = vround.ne.pseudo %v961
        %v1234 = vround.ne.pseudo %v962
        %v1235 = vround.ne.pseudo %v963
        %v1236 = vround.ne.pseudo %v964
        %v1237 = vround.ne.pseudo %v965
        %v1238 = vround.ne.pseudo %v966
        %v1239 = vround.ne.pseudo %v967
        %v1240 = vround.ne.pseudo %v968
        %v1241 = vround.ne.pseudo %v969
        %v1242 = vround.ne.pseudo %v970
        %v1243 = vround.ne.pseudo %v971
        %v1244 = vround.ne.pseudo %v972
        %v1245 = vround.ne.pseudo %v973
        %v1246 = vround.ne.pseudo %v974
        %v1247 = vround.ne.pseudo %v975
        %v1248 = vround.ne.pseudo %v976
        %v1249 = vround.ne.pseudo %v977
        %v1250 = vround.ne.pseudo %v978
        %v1251 = vround.ne.pseudo %v979
        %v1252 = vround.ne.pseudo %v980
        %v1253 = vround.ne.pseudo %v981
        %v1254 = vround.ne.pseudo %v982
        %v1255 = vround.ne.pseudo %v983
        %v1256 = vround.ne.pseudo %v984
        %v1257 = vround.ne.pseudo %v985
        %v1258 = vround.ne.pseudo %v986
        %v1259 = vmax.f32 %v987, 0.0
        %v1260 = vmax.f32 %v988, 0.0
        %v1261 = vmax.f32 %v989, 0.0
        %v1262 = vmax.f32 %v990, 0.0
        %v1263 = vmax.f32 %v991, 0.0
        %v1264 = vmax.f32 %v992, 0.0
        %v1265 = vmax.f32 %v993, 0.0
        %v1266 = vmax.f32 %v994, 0.0
        %v1267 = vmax.f32 %v995, 0.0
        %v1268 = vmax.f32 %v996, 0.0
        %v1269 = vmax.f32 %v997, 0.0
        %v1270 = vmax.f32 %v998, 0.0
        %v1271 = vmax.f32 %v999, 0.0
        %v1272 = vmax.f32 %v1000, 0.0
        %v1273 = vmax.f32 %v1001, 0.0
        %v1274 = vmax.f32 %v1002, 0.0
        %v1275 = vmax.f32 %v1003, 0.0
        %v1276 = vmax.f32 %v1004, 0.0
        %v1277 = vmax.f32 %v1005, 0.0
        %v1278 = vmax.f32 %v1006, 0.0
        %v1279 = vmax.f32 %v1007, 0.0
        %v1280 = vmax.f32 %v1008, 0.0
        %v1281 = vmax.f32 %v1009, 0.0
        %v1282 = vmax.f32 %v1010, 0.0
        %v1283 = vmax.f32 %v1011, 0.0
        %v1284 = vmax.f32 %v1012, 0.0
        %v1285 = vmax.f32 %v1013, 0.0
        %v1286 = vmax.f32 %v1014, 0.0
        %v1287 = vmax.f32 %v1015, 0.0
        %v1288 = vmax.f32 %v1016, 0.0
        %v1289 = vmax.f32 %v1017, 0.0
        %v1290 = vmax.f32 %v1018, 0.0
        %v1291 = vmax.f32 %v1019, 0.0
        %v1292 = vmax.f32 %v1020, 0.0
        %v1293 = vmax.f32 %v1021, 0.0
        %v1294 = vmax.f32 %v1022, 0.0
        %v1295 = vmax.f32 %v1023, 0.0
        %v1296 = vmax.f32 %v1024, 0.0
        %v1297 = vmax.f32 %v1025, 0.0
        %v1298 = vmax.f32 %v1026, 0.0
        %v1299 = vmax.f32 %v1027, 0.0
        %v1300 = vmax.f32 %v1028, 0.0
        %v1301 = vmax.f32 %v1029, 0.0
        %v1302 = vmax.f32 %v1030, 0.0
        %v1303 = vmax.f32 %v1031, 0.0
        %v1304 = vmax.f32 %v1032, 0.0
        %v1305 = vmax.f32 %v1033, 0.0
        %v1306 = vmax.f32 %v1034, 0.0
        %v1307 = vmax.f32 %v1035, 0.0
        %v1308 = vmax.f32 %v1036, 0.0
        %v1309 = vmax.f32 %v1037, 0.0
        %v1310 = vmax.f32 %v1038, 0.0
        %v1311 = vmax.f32 %v1039, 0.0
        %v1312 = vmax.f32 %v1040, 0.0
        %v1313 = vmax.f32 %v1041, 0.0
        %v1314 = vmax.f32 %v1042, 0.0
        %v1315 = vmax.f32 %v1043, 0.0
        %v1316 = vmax.f32 %v1044, 0.0
        %v1317 = vmax.f32 %v1045, 0.0
        %v1318 = vmax.f32 %v1046, 0.0
        %v1319 = vmax.f32 %v1047, 0.0
        %v1320 = vmax.f32 %v1048, 0.0
        %v1321 = vmax.f32 %v1049, 0.0
        %v1322 = vmax.f32 %v1050, 0.0
        %v1323 = vmax.f32 %v1051, 0.0
        %v1324 = vmax.f32 %v1052, 0.0
        %v1325 = vmax.f32 %v1053, 0.0
        %v1326 = vmax.f32 %v1054, 0.0
        %v1327 = vmax.f32 %v1055, 0.0
        %v1328 = vmax.f32 %v1056, 0.0
        %v1329 = vmax.f32 %v1057, 0.0
        %v1330 = vmax.f32 %v1058, 0.0
        %v1331 = vmax.f32 %v1059, 0.0
        %v1332 = vmax.f32 %v1060, 0.0
        %v1333 = vmax.f32 %v1061, 0.0
        %v1334 = vmax.f32 %v1062, 0.0
        %v1335 = vmax.f32 %v1063, 0.0
        %v1336 = vmax.f32 %v1064, 0.0
        %v1337 = vmax.f32 %v1065, 0.0
        %v1338 = vmax.f32 %v1066, 0.0
        %v1339 = vmax.f32 %v1067, 0.0
        %v1340 = vmax.f32 %v1068, 0.0
        %v1341 = vmax.f32 %v1069, 0.0
        %v1342 = vmax.f32 %v1070, 0.0
        %v1343 = vmax.f32 %v1071, 0.0
        %v1344 = vmax.f32 %v1072, 0.0
        %v1345 = vmax.f32 %v1073, 0.0
        %v1346 = vmax.f32 %v1074, 0.0
        %v1347 = vmax.f32 %v1075, 0.0
        %v1348 = vmax.f32 %v1076, 0.0
        %v1349 = vmax.f32 %v1077, 0.0
        %v1350 = vmax.f32 %v1078, 0.0
        %v1351 = vmax.f32 %v1079, 0.0
        %v1352 = vmax.f32 %v1080, 0.0
        %v1353 = vmax.f32 %v1081, 0.0
        %v1354 = vmax.f32 %v1082, 0.0
        %v1355 = vmax.f32 %v1083, 0.0
        %v1356 = vmax.f32 %v1084, 0.0
        %v1357 = vmax.f32 %v1085, 0.0
        %v1358 = vmax.f32 %v1086, 0.0
        %v1359 = vmax.f32 %v1087, 0.0
        %v1360 = vmax.f32 %v1088, 0.0
        %v1361 = vmax.f32 %v1089, 0.0
        %v1362 = vmax.f32 %v1090, 0.0
        %v1363 = vmax.f32 %v1091, 0.0
        %v1364 = vmax.f32 %v1092, 0.0
        %v1365 = vmax.f32 %v1093, 0.0
        %v1366 = vmax.f32 %v1094, 0.0
        %v1367 = vmax.f32 %v1095, 0.0
        %v1368 = vmax.f32 %v1096, 0.0
        %v1369 = vmax.f32 %v1097, 0.0
        %v1370 = vmax.f32 %v1098, 0.0
        %v1371 = vmax.f32 %v1099, 0.0
        %v1372 = vmax.f32 %v1100, 0.0
        %v1373 = vmax.f32 %v1101, 0.0
        %v1374 = vmax.f32 %v1102, 0.0
        %v1375 = vmax.f32 %v1103, 0.0
        %v1376 = vmax.f32 %v1104, 0.0
        %v1377 = vmax.f32 %v1105, 0.0
        %v1378 = vmax.f32 %v1106, 0.0
        %v1379 = vmax.f32 %v1107, 0.0
        %v1380 = vmax.f32 %v1108, 0.0
        %v1381 = vmax.f32 %v1109, 0.0
        %v1382 = vmax.f32 %v1110, 0.0
        %v1383 = vmax.f32 %v1111, 0.0
        %v1384 = vmax.f32 %v1112, 0.0
        %v1385 = vmax.f32 %v1113, 0.0
        %v1386 = vmax.f32 %v1114, 0.0
        %v1387 = vmax.f32 %v1115, 0.0
        %v1388 = vmax.f32 %v1116, 0.0
        %v1389 = vmax.f32 %v1117, 0.0
        %v1390 = vmax.f32 %v1118, 0.0
        %v1391 = vmax.f32 %v1119, 0.0
        %v1392 = vmax.f32 %v1120, 0.0
        %v1393 = vmax.f32 %v1121, 0.0
        %v1394 = vmax.f32 %v1122, 0.0
        %v1395 = vmax.f32 %v1123, 0.0
        %v1396 = vmax.f32 %v1124, 0.0
        %v1397 = vmax.f32 %v1125, 0.0
        %v1398 = vmax.f32 %v1126, 0.0
        %v1399 = vmax.f32 %v1127, 0.0
        %v1400 = vmax.f32 %v1128, 0.0
        %v1401 = vmax.f32 %v1129, 0.0
        %v1402 = vmax.f32 %v1130, 0.0
        %v1403 = vmax.f32 %v1131, 0.0
        %v1404 = vmax.f32 %v1132, 0.0
        %v1405 = vmax.f32 %v1133, 0.0
        %v1406 = vmax.f32 %v1134, 0.0
        %v1407 = vmax.f32 %v1135, 0.0
        %v1408 = vmax.f32 %v1136, 0.0
        %v1409 = vmax.f32 %v1137, 0.0
        %v1410 = vmax.f32 %v1138, 0.0
        %v1411 = vmax.f32 %v1139, 0.0
        %v1412 = vmax.f32 %v1140, 0.0
        %v1413 = vmax.f32 %v1141, 0.0
        %v1414 = vmax.f32 %v1142, 0.0
        %v1415 = vmax.f32 %v1143, 0.0
        %v1416 = vmax.f32 %v1144, 0.0
        %v1417 = vmax.f32 %v1145, 0.0
        %v1418 = vmax.f32 %v1146, 0.0
        %v1419 = vmax.f32 %v1147, 0.0
        %v1420 = vmax.f32 %v1148, 0.0
        %v1421 = vmax.f32 %v1149, 0.0
        %v1422 = vmax.f32 %v1150, 0.0
        %v1423 = vmax.f32 %v1151, 0.0
        %v1424 = vmax.f32 %v1152, 0.0
        %v1425 = vmax.f32 %v1153, 0.0
        %v1426 = vmax.f32 %v1154, 0.0
        %v1427 = vmax.f32 %v1155, 0.0
        %v1428 = vmax.f32 %v1156, 0.0
        %v1429 = vmax.f32 %v1157, 0.0
        %v1430 = vmax.f32 %v1158, 0.0
        %v1431 = vmax.f32 %v1159, 0.0
        %v1432 = vmax.f32 %v1160, 0.0
        %v1433 = vmax.f32 %v1161, 0.0
        %v1434 = vmax.f32 %v1162, 0.0
        %v1435 = vmax.f32 %v1163, 0.0
        %v1436 = vmax.f32 %v1164, 0.0
        %v1437 = vmax.f32 %v1165, 0.0
        %v1438 = vmax.f32 %v1166, 0.0
        %v1439 = vmax.f32 %v1167, 0.0
        %v1440 = vmax.f32 %v1168, 0.0
        %v1441 = vmax.f32 %v1169, 0.0
        %v1442 = vmax.f32 %v1170, 0.0
        %v1443 = vmax.f32 %v1171, 0.0
        %v1444 = vmax.f32 %v1172, 0.0
        %v1445 = vmax.f32 %v1173, 0.0
        %v1446 = vmax.f32 %v1174, 0.0
        %v1447 = vmax.f32 %v1175, 0.0
        %v1448 = vmax.f32 %v1176, 0.0
        %v1449 = vmax.f32 %v1177, 0.0
        %v1450 = vmax.f32 %v1178, 0.0
        %v1451 = vmax.f32 %v1179, 0.0
        %v1452 = vmax.f32 %v1180, 0.0
        %v1453 = vmax.f32 %v1181, 0.0
        %v1454 = vmax.f32 %v1182, 0.0
        %v1455 = vmax.f32 %v1183, 0.0
        %v1456 = vmax.f32 %v1184, 0.0
        %v1457 = vmax.f32 %v1185, 0.0
        %v1458 = vmax.f32 %v1186, 0.0
        %v1459 = vmax.f32 %v1187, 0.0
        %v1460 = vmax.f32 %v1188, 0.0
        %v1461 = vmax.f32 %v1189, 0.0
        %v1462 = vmax.f32 %v1190, 0.0
        %v1463 = vmax.f32 %v1191, 0.0
        %v1464 = vmax.f32 %v1192, 0.0
        %v1465 = vmax.f32 %v1193, 0.0
        %v1466 = vmax.f32 %v1194, 0.0
        %v1467 = vmax.f32 %v1195, 0.0
        %v1468 = vmax.f32 %v1196, 0.0
        %v1469 = vmax.f32 %v1197, 0.0
        %v1470 = vmax.f32 %v1198, 0.0
        %v1471 = vmax.f32 %v1199, 0.0
        %v1472 = vmax.f32 %v1200, 0.0
        %v1473 = vmax.f32 %v1201, 0.0
        %v1474 = vmax.f32 %v1202, 0.0
        %v1475 = vmax.f32 %v1203, 0.0
        %v1476 = vmax.f32 %v1204, 0.0
        %v1477 = vmax.f32 %v1205, 0.0
        %v1478 = vmax.f32 %v1206, 0.0
        %v1479 = vmax.f32 %v1207, 0.0
        %v1480 = vmax.f32 %v1208, 0.0
        %v1481 = vmax.f32 %v1209, 0.0
        %v1482 = vmax.f32 %v1210, 0.0
        %v1483 = vmax.f32 %v1211, 0.0
        %v1484 = vmax.f32 %v1212, 0.0
        %v1485 = vmax.f32 %v1213, 0.0
        %v1486 = vmax.f32 %v1214, 0.0
        %v1487 = vmax.f32 %v1215, 0.0
        %v1488 = vmax.f32 %v1216, 0.0
        %v1489 = vmax.f32 %v1217, 0.0
        %v1490 = vmax.f32 %v1218, 0.0
        %v1491 = vmax.f32 %v1219, 0.0
        %v1492 = vmax.f32 %v1220, 0.0
        %v1493 = vmax.f32 %v1221, 0.0
        %v1494 = vmax.f32 %v1222, 0.0
        %v1495 = vmax.f32 %v1223, 0.0
        %v1496 = vmax.f32 %v1224, 0.0
        %v1497 = vmax.f32 %v1225, 0.0
        %v1498 = vmax.f32 %v1226, 0.0
        %v1499 = vmax.f32 %v1227, 0.0
        %v1500 = vmax.f32 %v1228, 0.0
        %v1501 = vmax.f32 %v1229, 0.0
        %v1502 = vmax.f32 %v1230, 0.0
        %v1503 = vmax.f32 %v1231, 0.0
        %v1504 = vmax.f32 %v1232, 0.0
        %v1505 = vmax.f32 %v1233, 0.0
        %v1506 = vmax.f32 %v1234, 0.0
        %v1507 = vmax.f32 %v1235, 0.0
        %v1508 = vmax.f32 %v1236, 0.0
        %v1509 = vmax.f32 %v1237, 0.0
        %v1510 = vmax.f32 %v1238, 0.0
        %v1511 = vmax.f32 %v1239, 0.0
        %v1512 = vmax.f32 %v1240, 0.0
        %v1513 = vmax.f32 %v1241, 0.0
        %v1514 = vmax.f32 %v1242, 0.0
        %v1515 = vmax.f32 %v1243, 0.0
        %v1516 = vmax.f32 %v1244, 0.0
        %v1517 = vmax.f32 %v1245, 0.0
        %v1518 = vmax.f32 %v1246, 0.0
        %v1519 = vmax.f32 %v1247, 0.0
        %v1520 = vmax.f32 %v1248, 0.0
        %v1521 = vmax.f32 %v1249, 0.0
        %v1522 = vmax.f32 %v1250, 0.0
        %v1523 = vmax.f32 %v1251, 0.0
        %v1524 = vmax.f32 %v1252, 0.0
        %v1525 = vmax.f32 %v1253, 0.0
        %v1526 = vmax.f32 %v1254, 0.0
        %v1527 = vmax.f32 %v1255, 0.0
        %v1528 = vmax.f32 %v1256, 0.0
        %v1529 = vmax.f32 %v1257, 0.0
        %v1530 = vmax.f32 %v1258, 0.0
        %v1531 = vmin.f32 %v1259, 255.0
        %v1532 = vmin.f32 %v1260, 255.0
        %v1533 = vmin.f32 %v1261, 255.0
        %v1534 = vmin.f32 %v1262, 255.0
        %v1535 = vmin.f32 %v1263, 255.0
        %v1536 = vmin.f32 %v1264, 255.0
        %v1537 = vmin.f32 %v1265, 255.0
        %v1538 = vmin.f32 %v1266, 255.0
        %v1539 = vmin.f32 %v1267, 255.0
        %v1540 = vmin.f32 %v1268, 255.0
        %v1541 = vmin.f32 %v1269, 255.0
        %v1542 = vmin.f32 %v1270, 255.0
        %v1543 = vmin.f32 %v1271, 255.0
        %v1544 = vmin.f32 %v1272, 255.0
        %v1545 = vmin.f32 %v1273, 255.0
        %v1546 = vmin.f32 %v1274, 255.0
        %v1547 = vmin.f32 %v1275, 255.0
        %v1548 = vmin.f32 %v1276, 255.0
        %v1549 = vmin.f32 %v1277, 255.0
        %v1550 = vmin.f32 %v1278, 255.0
        %v1551 = vmin.f32 %v1279, 255.0
        %v1552 = vmin.f32 %v1280, 255.0
        %v1553 = vmin.f32 %v1281, 255.0
        %v1554 = vmin.f32 %v1282, 255.0
        %v1555 = vmin.f32 %v1283, 255.0
        %v1556 = vmin.f32 %v1284, 255.0
        %v1557 = vmin.f32 %v1285, 255.0
        %v1558 = vmin.f32 %v1286, 255.0
        %v1559 = vmin.f32 %v1287, 255.0
        %v1560 = vmin.f32 %v1288, 255.0
        %v1561 = vmin.f32 %v1289, 255.0
        %v1562 = vmin.f32 %v1290, 255.0
        %v1563 = vmin.f32 %v1291, 255.0
        %v1564 = vmin.f32 %v1292, 255.0
        %v1565 = vmin.f32 %v1293, 255.0
        %v1566 = vmin.f32 %v1294, 255.0
        %v1567 = vmin.f32 %v1295, 255.0
        %v1568 = vmin.f32 %v1296, 255.0
        %v1569 = vmin.f32 %v1297, 255.0
        %v1570 = vmin.f32 %v1298, 255.0
        %v1571 = vmin.f32 %v1299, 255.0
        %v1572 = vmin.f32 %v1300, 255.0
        %v1573 = vmin.f32 %v1301, 255.0
        %v1574 = vmin.f32 %v1302, 255.0
        %v1575 = vmin.f32 %v1303, 255.0
        %v1576 = vmin.f32 %v1304, 255.0
        %v1577 = vmin.f32 %v1305, 255.0
        %v1578 = vmin.f32 %v1306, 255.0
        %v1579 = vmin.f32 %v1307, 255.0
        %v1580 = vmin.f32 %v1308, 255.0
        %v1581 = vmin.f32 %v1309, 255.0
        %v1582 = vmin.f32 %v1310, 255.0
        %v1583 = vmin.f32 %v1311, 255.0
        %v1584 = vmin.f32 %v1312, 255.0
        %v1585 = vmin.f32 %v1313, 255.0
        %v1586 = vmin.f32 %v1314, 255.0
        %v1587 = vmin.f32 %v1315, 255.0
        %v1588 = vmin.f32 %v1316, 255.0
        %v1589 = vmin.f32 %v1317, 255.0
        %v1590 = vmin.f32 %v1318, 255.0
        %v1591 = vmin.f32 %v1319, 255.0
        %v1592 = vmin.f32 %v1320, 255.0
        %v1593 = vmin.f32 %v1321, 255.0
        %v1594 = vmin.f32 %v1322, 255.0
        %v1595 = vmin.f32 %v1323, 255.0
        %v1596 = vmin.f32 %v1324, 255.0
        %v1597 = vmin.f32 %v1325, 255.0
        %v1598 = vmin.f32 %v1326, 255.0
        %v1599 = vmin.f32 %v1327, 255.0
        %v1600 = vmin.f32 %v1328, 255.0
        %v1601 = vmin.f32 %v1329, 255.0
        %v1602 = vmin.f32 %v1330, 255.0
        %v1603 = vmin.f32 %v1331, 255.0
        %v1604 = vmin.f32 %v1332, 255.0
        %v1605 = vmin.f32 %v1333, 255.0
        %v1606 = vmin.f32 %v1334, 255.0
        %v1607 = vmin.f32 %v1335, 255.0
        %v1608 = vmin.f32 %v1336, 255.0
        %v1609 = vmin.f32 %v1337, 255.0
        %v1610 = vmin.f32 %v1338, 255.0
        %v1611 = vmin.f32 %v1339, 255.0
        %v1612 = vmin.f32 %v1340, 255.0
        %v1613 = vmin.f32 %v1341, 255.0
        %v1614 = vmin.f32 %v1342, 255.0
        %v1615 = vmin.f32 %v1343, 255.0
        %v1616 = vmin.f32 %v1344, 255.0
        %v1617 = vmin.f32 %v1345, 255.0
        %v1618 = vmin.f32 %v1346, 255.0
        %v1619 = vmin.f32 %v1347, 255.0
        %v1620 = vmin.f32 %v1348, 255.0
        %v1621 = vmin.f32 %v1349, 255.0
        %v1622 = vmin.f32 %v1350, 255.0
        %v1623 = vmin.f32 %v1351, 255.0
        %v1624 = vmin.f32 %v1352, 255.0
        %v1625 = vmin.f32 %v1353, 255.0
        %v1626 = vmin.f32 %v1354, 255.0
        %v1627 = vmin.f32 %v1355, 255.0
        %v1628 = vmin.f32 %v1356, 255.0
        %v1629 = vmin.f32 %v1357, 255.0
        %v1630 = vmin.f32 %v1358, 255.0
        %v1631 = vmin.f32 %v1359, 255.0
        %v1632 = vmin.f32 %v1360, 255.0
        %v1633 = vmin.f32 %v1361, 255.0
        %v1634 = vmin.f32 %v1362, 255.0
        %v1635 = vmin.f32 %v1363, 255.0
        %v1636 = vmin.f32 %v1364, 255.0
        %v1637 = vmin.f32 %v1365, 255.0
        %v1638 = vmin.f32 %v1366, 255.0
        %v1639 = vmin.f32 %v1367, 255.0
        %v1640 = vmin.f32 %v1368, 255.0
        %v1641 = vmin.f32 %v1369, 255.0
        %v1642 = vmin.f32 %v1370, 255.0
        %v1643 = vmin.f32 %v1371, 255.0
        %v1644 = vmin.f32 %v1372, 255.0
        %v1645 = vmin.f32 %v1373, 255.0
        %v1646 = vmin.f32 %v1374, 255.0
        %v1647 = vmin.f32 %v1375, 255.0
        %v1648 = vmin.f32 %v1376, 255.0
        %v1649 = vmin.f32 %v1377, 255.0
        %v1650 = vmin.f32 %v1378, 255.0
        %v1651 = vmin.f32 %v1379, 255.0
        %v1652 = vmin.f32 %v1380, 255.0
        %v1653 = vmin.f32 %v1381, 255.0
        %v1654 = vmin.f32 %v1382, 255.0
        %v1655 = vmin.f32 %v1383, 255.0
        %v1656 = vmin.f32 %v1384, 255.0
        %v1657 = vmin.f32 %v1385, 255.0
        %v1658 = vmin.f32 %v1386, 255.0
        %v1659 = vmin.f32 %v1387, 255.0
        %v1660 = vmin.f32 %v1388, 255.0
        %v1661 = vmin.f32 %v1389, 255.0
        %v1662 = vmin.f32 %v1390, 255.0
        %v1663 = vmin.f32 %v1391, 255.0
        %v1664 = vmin.f32 %v1392, 255.0
        %v1665 = vmin.f32 %v1393, 255.0
        %v1666 = vmin.f32 %v1394, 255.0
        %v1667 = vmin.f32 %v1395, 255.0
        %v1668 = vmin.f32 %v1396, 255.0
        %v1669 = vmin.f32 %v1397, 255.0
        %v1670 = vmin.f32 %v1398, 255.0
        %v1671 = vmin.f32 %v1399, 255.0
        %v1672 = vmin.f32 %v1400, 255.0
        %v1673 = vmin.f32 %v1401, 255.0
        %v1674 = vmin.f32 %v1402, 255.0
        %v1675 = vmin.f32 %v1403, 255.0
        %v1676 = vmin.f32 %v1404, 255.0
        %v1677 = vmin.f32 %v1405, 255.0
        %v1678 = vmin.f32 %v1406, 255.0
        %v1679 = vmin.f32 %v1407, 255.0
        %v1680 = vmin.f32 %v1408, 255.0
        %v1681 = vmin.f32 %v1409, 255.0
        %v1682 = vmin.f32 %v1410, 255.0
        %v1683 = vmin.f32 %v1411, 255.0
        %v1684 = vmin.f32 %v1412, 255.0
        %v1685 = vmin.f32 %v1413, 255.0
        %v1686 = vmin.f32 %v1414, 255.0
        %v1687 = vmin.f32 %v1415, 255.0
        %v1688 = vmin.f32 %v1416, 255.0
        %v1689 = vmin.f32 %v1417, 255.0
        %v1690 = vmin.f32 %v1418, 255.0
        %v1691 = vmin.f32 %v1419, 255.0
        %v1692 = vmin.f32 %v1420, 255.0
        %v1693 = vmin.f32 %v1421, 255.0
        %v1694 = vmin.f32 %v1422, 255.0
        %v1695 = vmin.f32 %v1423, 255.0
        %v1696 = vmin.f32 %v1424, 255.0
        %v1697 = vmin.f32 %v1425, 255.0
        %v1698 = vmin.f32 %v1426, 255.0
        %v1699 = vmin.f32 %v1427, 255.0
        %v1700 = vmin.f32 %v1428, 255.0
        %v1701 = vmin.f32 %v1429, 255.0
        %v1702 = vmin.f32 %v1430, 255.0
        %v1703 = vmin.f32 %v1431, 255.0
        %v1704 = vmin.f32 %v1432, 255.0
        %v1705 = vmin.f32 %v1433, 255.0
        %v1706 = vmin.f32 %v1434, 255.0
        %v1707 = vmin.f32 %v1435, 255.0
        %v1708 = vmin.f32 %v1436, 255.0
        %v1709 = vmin.f32 %v1437, 255.0
        %v1710 = vmin.f32 %v1438, 255.0
        %v1711 = vmin.f32 %v1439, 255.0
        %v1712 = vmin.f32 %v1440, 255.0
        %v1713 = vmin.f32 %v1441, 255.0
        %v1714 = vmin.f32 %v1442, 255.0
        %v1715 = vmin.f32 %v1443, 255.0
        %v1716 = vmin.f32 %v1444, 255.0
        %v1717 = vmin.f32 %v1445, 255.0
        %v1718 = vmin.f32 %v1446, 255.0
        %v1719 = vmin.f32 %v1447, 255.0
        %v1720 = vmin.f32 %v1448, 255.0
        %v1721 = vmin.f32 %v1449, 255.0
        %v1722 = vmin.f32 %v1450, 255.0
        %v1723 = vmin.f32 %v1451, 255.0
        %v1724 = vmin.f32 %v1452, 255.0
        %v1725 = vmin.f32 %v1453, 255.0
        %v1726 = vmin.f32 %v1454, 255.0
        %v1727 = vmin.f32 %v1455, 255.0
        %v1728 = vmin.f32 %v1456, 255.0
        %v1729 = vmin.f32 %v1457, 255.0
        %v1730 = vmin.f32 %v1458, 255.0
        %v1731 = vmin.f32 %v1459, 255.0
        %v1732 = vmin.f32 %v1460, 255.0
        %v1733 = vmin.f32 %v1461, 255.0
        %v1734 = vmin.f32 %v1462, 255.0
        %v1735 = vmin.f32 %v1463, 255.0
        %v1736 = vmin.f32 %v1464, 255.0
        %v1737 = vmin.f32 %v1465, 255.0
        %v1738 = vmin.f32 %v1466, 255.0
        %v1739 = vmin.f32 %v1467, 255.0
        %v1740 = vmin.f32 %v1468, 255.0
        %v1741 = vmin.f32 %v1469, 255.0
        %v1742 = vmin.f32 %v1470, 255.0
        %v1743 = vmin.f32 %v1471, 255.0
        %v1744 = vmin.f32 %v1472, 255.0
        %v1745 = vmin.f32 %v1473, 255.0
        %v1746 = vmin.f32 %v1474, 255.0
        %v1747 = vmin.f32 %v1475, 255.0
        %v1748 = vmin.f32 %v1476, 255.0
        %v1749 = vmin.f32 %v1477, 255.0
        %v1750 = vmin.f32 %v1478, 255.0
        %v1751 = vmin.f32 %v1479, 255.0
        %v1752 = vmin.f32 %v1480, 255.0
        %v1753 = vmin.f32 %v1481, 255.0
        %v1754 = vmin.f32 %v1482, 255.0
        %v1755 = vmin.f32 %v1483, 255.0
        %v1756 = vmin.f32 %v1484, 255.0
        %v1757 = vmin.f32 %v1485, 255.0
        %v1758 = vmin.f32 %v1486, 255.0
        %v1759 = vmin.f32 %v1487, 255.0
        %v1760 = vmin.f32 %v1488, 255.0
        %v1761 = vmin.f32 %v1489, 255.0
        %v1762 = vmin.f32 %v1490, 255.0
        %v1763 = vmin.f32 %v1491, 255.0
        %v1764 = vmin.f32 %v1492, 255.0
        %v1765 = vmin.f32 %v1493, 255.0
        %v1766 = vmin.f32 %v1494, 255.0
        %v1767 = vmin.f32 %v1495, 255.0
        %v1768 = vmin.f32 %v1496, 255.0
        %v1769 = vmin.f32 %v1497, 255.0
        %v1770 = vmin.f32 %v1498, 255.0
        %v1771 = vmin.f32 %v1499, 255.0
        %v1772 = vmin.f32 %v1500, 255.0
        %v1773 = vmin.f32 %v1501, 255.0
        %v1774 = vmin.f32 %v1502, 255.0
        %v1775 = vmin.f32 %v1503, 255.0
        %v1776 = vmin.f32 %v1504, 255.0
        %v1777 = vmin.f32 %v1505, 255.0
        %v1778 = vmin.f32 %v1506, 255.0
        %v1779 = vmin.f32 %v1507, 255.0
        %v1780 = vmin.f32 %v1508, 255.0
        %v1781 = vmin.f32 %v1509, 255.0
        %v1782 = vmin.f32 %v1510, 255.0
        %v1783 = vmin.f32 %v1511, 255.0
        %v1784 = vmin.f32 %v1512, 255.0
        %v1785 = vmin.f32 %v1513, 255.0
        %v1786 = vmin.f32 %v1514, 255.0
        %v1787 = vmin.f32 %v1515, 255.0
        %v1788 = vmin.f32 %v1516, 255.0
        %v1789 = vmin.f32 %v1517, 255.0
        %v1790 = vmin.f32 %v1518, 255.0
        %v1791 = vmin.f32 %v1519, 255.0
        %v1792 = vmin.f32 %v1520, 255.0
        %v1793 = vmin.f32 %v1521, 255.0
        %v1794 = vmin.f32 %v1522, 255.0
        %v1795 = vmin.f32 %v1523, 255.0
        %v1796 = vmin.f32 %v1524, 255.0
        %v1797 = vmin.f32 %v1525, 255.0
        %v1798 = vmin.f32 %v1526, 255.0
        %v1799 = vmin.f32 %v1527, 255.0
        %v1800 = vmin.f32 %v1528, 255.0
        %v1801 = vmin.f32 %v1529, 255.0
        %v1802 = vmin.f32 %v1530, 255.0
        %v1803 = vstv %s166
        %v1804 = vmul.f32 %v1531, %v1803
        %v1805 = vmul.f32 %v1532, %v1803
        %v1806 = vmul.f32 %v1533, %v1803
        %v1807 = vmul.f32 %v1534, %v1803
        %v1808 = vmul.f32 %v1535, %v1803
        %v1809 = vmul.f32 %v1536, %v1803
        %v1810 = vmul.f32 %v1537, %v1803
        %v1811 = vmul.f32 %v1538, %v1803
        %v1812 = vmul.f32 %v1539, %v1803
        %v1813 = vmul.f32 %v1540, %v1803
        %v1814 = vmul.f32 %v1541, %v1803
        %v1815 = vmul.f32 %v1542, %v1803
        %v1816 = vmul.f32 %v1543, %v1803
        %v1817 = vmul.f32 %v1544, %v1803
        %v1818 = vmul.f32 %v1545, %v1803
        %v1819 = vmul.f32 %v1546, %v1803
        %v1820 = vmul.f32 %v1547, %v1803
        %v1821 = vmul.f32 %v1548, %v1803
        %v1822 = vmul.f32 %v1549, %v1803
        %v1823 = vmul.f32 %v1550, %v1803
        %v1824 = vmul.f32 %v1551, %v1803
        %v1825 = vmul.f32 %v1552, %v1803
        %v1826 = vmul.f32 %v1553, %v1803
        %v1827 = vmul.f32 %v1554, %v1803
        %v1828 = vmul.f32 %v1555, %v1803
        %v1829 = vmul.f32 %v1556, %v1803
        %v1830 = vmul.f32 %v1557, %v1803
        %v1831 = vmul.f32 %v1558, %v1803
        %v1832 = vmul.f32 %v1559, %v1803
        %v1833 = vmul.f32 %v1560, %v1803
        %v1834 = vmul.f32 %v1561, %v1803
        %v1835 = vmul.f32 %v1562, %v1803
        %v1836 = vmul.f32 %v1563, %v1803
        %v1837 = vmul.f32 %v1564, %v1803
        %v1838 = vmul.f32 %v1565, %v1803
        %v1839 = vmul.f32 %v1566, %v1803
        %v1840 = vmul.f32 %v1567, %v1803
        %v1841 = vmul.f32 %v1568, %v1803
        %v1842 = vmul.f32 %v1569, %v1803
        %v1843 = vmul.f32 %v1570, %v1803
        %v1844 = vmul.f32 %v1571, %v1803
        %v1845 = vmul.f32 %v1572, %v1803
        %v1846 = vmul.f32 %v1573, %v1803
        %v1847 = vmul.f32 %v1574, %v1803
        %v1848 = vmul.f32 %v1575, %v1803
        %v1849 = vmul.f32 %v1576, %v1803
        %v1850 = vmul.f32 %v1577, %v1803
        %v1851 = vmul.f32 %v1578, %v1803
        %v1852 = vmul.f32 %v1579, %v1803
        %v1853 = vmul.f32 %v1580, %v1803
        %v1854 = vmul.f32 %v1581, %v1803
        %v1855 = vmul.f32 %v1582, %v1803
        %v1856 = vmul.f32 %v1583, %v1803
        %v1857 = vmul.f32 %v1584, %v1803
        %v1858 = vmul.f32 %v1585, %v1803
        %v1859 = vmul.f32 %v1586, %v1803
        %v1860 = vmul.f32 %v1587, %v1803
        %v1861 = vmul.f32 %v1588, %v1803
        %v1862 = vmul.f32 %v1589, %v1803
        %v1863 = vmul.f32 %v1590, %v1803
        %v1864 = vmul.f32 %v1591, %v1803
        %v1865 = vmul.f32 %v1592, %v1803
        %v1866 = vmul.f32 %v1593, %v1803
        %v1867 = vmul.f32 %v1594, %v1803
        %v1868 = vmul.f32 %v1595, %v1803
        %v1869 = vmul.f32 %v1596, %v1803
        %v1870 = vmul.f32 %v1597, %v1803
        %v1871 = vmul.f32 %v1598, %v1803
        %v1872 = vmul.f32 %v1599, %v1803
        %v1873 = vmul.f32 %v1600, %v1803
        %v1874 = vmul.f32 %v1601, %v1803
        %v1875 = vmul.f32 %v1602, %v1803
        %v1876 = vmul.f32 %v1603, %v1803
        %v1877 = vmul.f32 %v1604, %v1803
        %v1878 = vmul.f32 %v1605, %v1803
        %v1879 = vmul.f32 %v1606, %v1803
        %v1880 = vmul.f32 %v1607, %v1803
        %v1881 = vmul.f32 %v1608, %v1803
        %v1882 = vmul.f32 %v1609, %v1803
        %v1883 = vmul.f32 %v1610, %v1803
        %v1884 = vmul.f32 %v1611, %v1803
        %v1885 = vmul.f32 %v1612, %v1803
        %v1886 = vmul.f32 %v1613, %v1803
        %v1887 = vmul.f32 %v1614, %v1803
        %v1888 = vmul.f32 %v1615, %v1803
        %v1889 = vmul.f32 %v1616, %v1803
        %v1890 = vmul.f32 %v1617, %v1803
        %v1891 = vmul.f32 %v1618, %v1803
        %v1892 = vmul.f32 %v1619, %v1803
        %v1893 = vmul.f32 %v1620, %v1803
        %v1894 = vmul.f32 %v1621, %v1803
        %v1895 = vmul.f32 %v1622, %v1803
        %v1896 = vmul.f32 %v1623, %v1803
        %v1897 = vmul.f32 %v1624, %v1803
        %v1898 = vmul.f32 %v1625, %v1803
        %v1899 = vmul.f32 %v1626, %v1803
        %v1900 = vmul.f32 %v1627, %v1803
        %v1901 = vmul.f32 %v1628, %v1803
        %v1902 = vmul.f32 %v1629, %v1803
        %v1903 = vmul.f32 %v1630, %v1803
        %v1904 = vmul.f32 %v1631, %v1803
        %v1905 = vmul.f32 %v1632, %v1803
        %v1906 = vmul.f32 %v1633, %v1803
        %v1907 = vmul.f32 %v1634, %v1803
        %v1908 = vmul.f32 %v1635, %v1803
        %v1909 = vmul.f32 %v1636, %v1803
        %v1910 = vmul.f32 %v1637, %v1803
        %v1911 = vmul.f32 %v1638, %v1803
        %v1912 = vmul.f32 %v1639, %v1803
        %v1913 = vmul.f32 %v1640, %v1803
        %v1914 = vmul.f32 %v1641, %v1803
        %v1915 = vmul.f32 %v1642, %v1803
        %v1916 = vmul.f32 %v1643, %v1803
        %v1917 = vmul.f32 %v1644, %v1803
        %v1918 = vmul.f32 %v1645, %v1803
        %v1919 = vmul.f32 %v1646, %v1803
        %v1920 = vmul.f32 %v1647, %v1803
        %v1921 = vmul.f32 %v1648, %v1803
        %v1922 = vmul.f32 %v1649, %v1803
        %v1923 = vmul.f32 %v1650, %v1803
        %v1924 = vmul.f32 %v1651, %v1803
        %v1925 = vmul.f32 %v1652, %v1803
        %v1926 = vmul.f32 %v1653, %v1803
        %v1927 = vmul.f32 %v1654, %v1803
        %v1928 = vmul.f32 %v1655, %v1803
        %v1929 = vmul.f32 %v1656, %v1803
        %v1930 = vmul.f32 %v1657, %v1803
        %v1931 = vmul.f32 %v1658, %v1803
        %v1932 = vmul.f32 %v1659, %v1803
        %v1933 = vmul.f32 %v1660, %v1803
        %v1934 = vmul.f32 %v1661, %v1803
        %v1935 = vmul.f32 %v1662, %v1803
        %v1936 = vmul.f32 %v1663, %v1803
        %v1937 = vmul.f32 %v1664, %v1803
        %v1938 = vmul.f32 %v1665, %v1803
        %v1939 = vmul.f32 %v1666, %v1803
        %v1940 = vmul.f32 %v1667, %v1803
        %v1941 = vmul.f32 %v1668, %v1803
        %v1942 = vmul.f32 %v1669, %v1803
        %v1943 = vmul.f32 %v1670, %v1803
        %v1944 = vmul.f32 %v1671, %v1803
        %v1945 = vmul.f32 %v1672, %v1803
        %v1946 = vmul.f32 %v1673, %v1803
        %v1947 = vmul.f32 %v1674, %v1803
        %v1948 = vmul.f32 %v1675, %v1803
        %v1949 = vmul.f32 %v1676, %v1803
        %v1950 = vmul.f32 %v1677, %v1803
        %v1951 = vmul.f32 %v1678, %v1803
        %v1952 = vmul.f32 %v1679, %v1803
        %v1953 = vmul.f32 %v1680, %v1803
        %v1954 = vmul.f32 %v1681, %v1803
        %v1955 = vmul.f32 %v1682, %v1803
        %v1956 = vmul.f32 %v1683, %v1803
        %v1957 = vmul.f32 %v1684, %v1803
        %v1958 = vmul.f32 %v1685, %v1803
        %v1959 = vmul.f32 %v1686, %v1803
        %v1960 = vmul.f32 %v1687, %v1803
        %v1961 = vmul.f32 %v1688, %v1803
        %v1962 = vmul.f32 %v1689, %v1803
        %v1963 = vmul.f32 %v1690, %v1803
        %v1964 = vmul.f32 %v1691, %v1803
        %v1965 = vmul.f32 %v1692, %v1803
        %v1966 = vmul.f32 %v1693, %v1803
        %v1967 = vmul.f32 %v1694, %v1803
        %v1968 = vmul.f32 %v1695, %v1803
        %v1969 = vmul.f32 %v1696, %v1803
        %v1970 = vmul.f32 %v1697, %v1803
        %v1971 = vmul.f32 %v1698, %v1803
        %v1972 = vmul.f32 %v1699, %v1803
        %v1973 = vmul.f32 %v1700, %v1803
        %v1974 = vmul.f32 %v1701, %v1803
        %v1975 = vmul.f32 %v1702, %v1803
        %v1976 = vmul.f32 %v1703, %v1803
        %v1977 = vmul.f32 %v1704, %v1803
        %v1978 = vmul.f32 %v1705, %v1803
        %v1979 = vmul.f32 %v1706, %v1803
        %v1980 = vmul.f32 %v1707, %v1803
        %v1981 = vmul.f32 %v1708, %v1803
        %v1982 = vmul.f32 %v1709, %v1803
        %v1983 = vmul.f32 %v1710, %v1803
        %v1984 = vmul.f32 %v1711, %v1803
        %v1985 = vmul.f32 %v1712, %v1803
        %v1986 = vmul.f32 %v1713, %v1803
        %v1987 = vmul.f32 %v1714, %v1803
        %v1988 = vmul.f32 %v1715, %v1803
        %v1989 = vmul.f32 %v1716, %v1803
        %v1990 = vmul.f32 %v1717, %v1803
        %v1991 = vmul.f32 %v1718, %v1803
        %v1992 = vmul.f32 %v1719, %v1803
        %v1993 = vmul.f32 %v1720, %v1803
        %v1994 = vmul.f32 %v1721, %v1803
        %v1995 = vmul.f32 %v1722, %v1803
        %v1996 = vmul.f32 %v1723, %v1803
        %v1997 = vmul.f32 %v1724, %v1803
        %v1998 = vmul.f32 %v1725, %v1803
        %v1999 = vmul.f32 %v1726, %v1803
        %v2000 = vmul.f32 %v1727, %v1803
        %v2001 = vmul.f32 %v1728, %v1803
        %v2002 = vmul.f32 %v1729, %v1803
        %v2003 = vmul.f32 %v1730, %v1803
        %v2004 = vmul.f32 %v1731, %v1803
        %v2005 = vmul.f32 %v1732, %v1803
        %v2006 = vmul.f32 %v1733, %v1803
        %v2007 = vmul.f32 %v1734, %v1803
        %v2008 = vmul.f32 %v1735, %v1803
        %v2009 = vmul.f32 %v1736, %v1803
        %v2010 = vmul.f32 %v1737, %v1803
        %v2011 = vmul.f32 %v1738, %v1803
        %v2012 = vmul.f32 %v1739, %v1803
        %v2013 = vmul.f32 %v1740, %v1803
        %v2014 = vmul.f32 %v1741, %v1803
        %v2015 = vmul.f32 %v1742, %v1803
        %v2016 = vmul.f32 %v1743, %v1803
        %v2017 = vmul.f32 %v1744, %v1803
        %v2018 = vmul.f32 %v1745, %v1803
        %v2019 = vmul.f32 %v1746, %v1803
        %v2020 = vmul.f32 %v1747, %v1803
        %v2021 = vmul.f32 %v1748, %v1803
        %v2022 = vmul.f32 %v1749, %v1803
        %v2023 = vmul.f32 %v1750, %v1803
        %v2024 = vmul.f32 %v1751, %v1803
        %v2025 = vmul.f32 %v1752, %v1803
        %v2026 = vmul.f32 %v1753, %v1803
        %v2027 = vmul.f32 %v1754, %v1803
        %v2028 = vmul.f32 %v1755, %v1803
        %v2029 = vmul.f32 %v1756, %v1803
        %v2030 = vmul.f32 %v1757, %v1803
        %v2031 = vmul.f32 %v1758, %v1803
        %v2032 = vmul.f32 %v1759, %v1803
        %v2033 = vmul.f32 %v1760, %v1803
        %v2034 = vmul.f32 %v1761, %v1803
        %v2035 = vmul.f32 %v1762, %v1803
        %v2036 = vmul.f32 %v1763, %v1803
        %v2037 = vmul.f32 %v1764, %v1803
        %v2038 = vmul.f32 %v1765, %v1803
        %v2039 = vmul.f32 %v1766, %v1803
        %v2040 = vmul.f32 %v1767, %v1803
        %v2041 = vmul.f32 %v1768, %v1803
        %v2042 = vmul.f32 %v1769, %v1803
        %v2043 = vmul.f32 %v1770, %v1803
        %v2044 = vmul.f32 %v1771, %v1803
        %v2045 = vmul.f32 %v1772, %v1803
        %v2046 = vmul.f32 %v1773, %v1803
        %v2047 = vmul.f32 %v1774, %v1803
        %v2048 = vmul.f32 %v1775, %v1803
        %v2049 = vmul.f32 %v1776, %v1803
        %v2050 = vmul.f32 %v1777, %v1803
        %v2051 = vmul.f32 %v1778, %v1803
        %v2052 = vmul.f32 %v1779, %v1803
        %v2053 = vmul.f32 %v1780, %v1803
        %v2054 = vmul.f32 %v1781, %v1803
        %v2055 = vmul.f32 %v1782, %v1803
        %v2056 = vmul.f32 %v1783, %v1803
        %v2057 = vmul.f32 %v1784, %v1803
        %v2058 = vmul.f32 %v1785, %v1803
        %v2059 = vmul.f32 %v1786, %v1803
        %v2060 = vmul.f32 %v1787, %v1803
        %v2061 = vmul.f32 %v1788, %v1803
        %v2062 = vmul.f32 %v1789, %v1803
        %v2063 = vmul.f32 %v1790, %v1803
        %v2064 = vmul.f32 %v1791, %v1803
        %v2065 = vmul.f32 %v1792, %v1803
        %v2066 = vmul.f32 %v1793, %v1803
        %v2067 = vmul.f32 %v1794, %v1803
        %v2068 = vmul.f32 %v1795, %v1803
        %v2069 = vmul.f32 %v1796, %v1803
        %v2070 = vmul.f32 %v1797, %v1803
        %v2071 = vmul.f32 %v1798, %v1803
        %v2072 = vmul.f32 %v1799, %v1803
        %v2073 = vmul.f32 %v1800, %v1803
        %v2074 = vmul.f32 %v1801, %v1803
        %v2075 = vmul.f32 %v1802, %v1803
        %2076 = vst [vmem:[%s163] sm:$0xff] %v1804
        %2077 = vst [vmem:[%s163 + $0x8] sm:$0xff] %v1805
        %2078 = vst [vmem:[%s163 + $0x10] sm:$0xff] %v1806
        %2079 = vst [vmem:[%s163 + $0x18] sm:$0xff] %v1807
        %2080 = vst [vmem:[%s163 + $0x20] sm:$0xff] %v1808
        %2081 = vst [vmem:[%s163 + $0x28] sm:$0xff] %v1809
        %2082 = vst [vmem:[%s163 + $0x30] sm:$0xff] %v1810
        %2083 = vst [vmem:[%s163 + $0x38] sm:$0xff] %v1811
        %2084 = vst [vmem:[%s163 + $0x40] sm:$0xff] %v1812
        %2085 = vst [vmem:[%s163 + $0x48] sm:$0xff] %v1813
        %2086 = vst [vmem:[%s163 + $0x50] sm:$0xff] %v1814
        %2087 = vst [vmem:[%s163 + $0x58] sm:$0xff] %v1815
        %2088 = vst [vmem:[%s163 + $0x60] sm:$0xff] %v1816
        %2089 = vst [vmem:[%s163 + $0x68] sm:$0xff] %v1817
        %2090 = vst [vmem:[%s163 + $0x70] sm:$0xff] %v1818
        %2091 = vst [vmem:[%s163 + $0x78] sm:$0xff] %v1819
        %2092 = vst [vmem:[%s163 + $0x80] sm:$0xff] %v1820
        %2093 = vst [vmem:[%s163 + $0x88] sm:$0xff] %v1821
        %2094 = vst [vmem:[%s163 + $0x90] sm:$0xff] %v1822
        %2095 = vst [vmem:[%s163 + $0x98] sm:$0xff] %v1823
        %2096 = vst [vmem:[%s163 + $0xa0] sm:$0xff] %v1824
        %2097 = vst [vmem:[%s163 + $0xa8] sm:$0xff] %v1825
        %2098 = vst [vmem:[%s163 + $0xb0] sm:$0xff] %v1826
        %2099 = vst [vmem:[%s163 + $0xb8] sm:$0xff] %v1827
        %2100 = vst [vmem:[%s163 + $0xc0] sm:$0xff] %v1828
        %2101 = vst [vmem:[%s163 + $0xc8] sm:$0xff] %v1829
        %2102 = vst [vmem:[%s163 + $0xd0] sm:$0xff] %v1830
        %2103 = vst [vmem:[%s163 + $0xd8] sm:$0xff] %v1831
        %2104 = vst [vmem:[%s163 + $0xe0] sm:$0xff] %v1832
        %2105 = vst [vmem:[%s163 + $0xe8] sm:$0xff] %v1833
        %2106 = vst [vmem:[%s163 + $0xf0] sm:$0xff] %v1834
        %2107 = vst [vmem:[%s163 + $0xf8] sm:$0xff] %v1835
        %2108 = vst [vmem:[%s163 + $0x100] sm:$0xff] %v1836
        %2109 = vst [vmem:[%s163 + $0x108] sm:$0xff] %v1837
        %2110 = vst [vmem:[%s163 + $0x110] sm:$0xff] %v1838
        %2111 = vst [vmem:[%s163 + $0x118] sm:$0xff] %v1839
        %2112 = vst [vmem:[%s163 + $0x120] sm:$0xff] %v1840
        %2113 = vst [vmem:[%s163 + $0x128] sm:$0xff] %v1841
        %2114 = vst [vmem:[%s163 + $0x130] sm:$0xff] %v1842
        %2115 = vst [vmem:[%s163 + $0x138] sm:$0xff] %v1843
        %2116 = vst [vmem:[%s163 + $0x140] sm:$0xff] %v1844
        %2117 = vst [vmem:[%s163 + $0x148] sm:$0xff] %v1845
        %2118 = vst [vmem:[%s163 + $0x150] sm:$0xff] %v1846
        %2119 = vst [vmem:[%s163 + $0x158] sm:$0xff] %v1847
        %2120 = vst [vmem:[%s163 + $0x160] sm:$0xff] %v1848
        %2121 = vst [vmem:[%s163 + $0x168] sm:$0xff] %v1849
        %2122 = vst [vmem:[%s163 + $0x170] sm:$0xff] %v1850
        %2123 = vst [vmem:[%s163 + $0x178] sm:$0xff] %v1851
        %2124 = vst [vmem:[%s163 + $0x180] sm:$0xff] %v1852
        %2125 = vst [vmem:[%s163 + $0x188] sm:$0xff] %v1853
        %2126 = vst [vmem:[%s163 + $0x190] sm:$0xff] %v1854
        %2127 = vst [vmem:[%s163 + $0x198] sm:$0xff] %v1855
        %2128 = vst [vmem:[%s163 + $0x1a0] sm:$0xff] %v1856
        %2129 = vst [vmem:[%s163 + $0x1a8] sm:$0xff] %v1857
        %2130 = vst [vmem:[%s163 + $0x1b0] sm:$0xff] %v1858
        %2131 = vst [vmem:[%s163 + $0x1b8] sm:$0xff] %v1859
        %2132 = vst [vmem:[%s163 + $0x1c0] sm:$0xff] %v1860
        %2133 = vst [vmem:[%s163 + $0x1c8] sm:$0xff] %v1861
        %2134 = vst [vmem:[%s163 + $0x1d0] sm:$0xff] %v1862
        %2135 = vst [vmem:[%s163 + $0x1d8] sm:$0xff] %v1863
        %2136 = vst [vmem:[%s163 + $0x1e0] sm:$0xff] %v1864
        %2137 = vst [vmem:[%s163 + $0x1e8] sm:$0xff] %v1865
        %2138 = vst [vmem:[%s163 + $0x1f0] sm:$0xff] %v1866
        %2139 = vst [vmem:[%s163 + $0x1f8] sm:$0xff] %v1867
        %2140 = vst [vmem:[%s163 + $0x200] sm:$0xff] %v1868
        %2141 = vst [vmem:[%s163 + $0x208] sm:$0xff] %v1869
        %2142 = vst [vmem:[%s163 + $0x210] sm:$0xff] %v1870
        %2143 = vst [vmem:[%s163 + $0x218] sm:$0xff] %v1871
        %2144 = vst [vmem:[%s163 + $0x220] sm:$0xff] %v1872
        %2145 = vst [vmem:[%s163 + $0x228] sm:$0xff] %v1873
        %2146 = vst [vmem:[%s163 + $0x230] sm:$0xff] %v1874
        %2147 = vst [vmem:[%s163 + $0x238] sm:$0xff] %v1875
        %2148 = vst [vmem:[%s163 + $0x240] sm:$0xff] %v1876
        %2149 = vst [vmem:[%s163 + $0x248] sm:$0xff] %v1877
        %2150 = vst [vmem:[%s163 + $0x250] sm:$0xff] %v1878
        %2151 = vst [vmem:[%s163 + $0x258] sm:$0xff] %v1879
        %2152 = vst [vmem:[%s163 + $0x260] sm:$0xff] %v1880
        %2153 = vst [vmem:[%s163 + $0x268] sm:$0xff] %v1881
        %2154 = vst [vmem:[%s163 + $0x270] sm:$0xff] %v1882
        %2155 = vst [vmem:[%s163 + $0x278] sm:$0xff] %v1883
        %2156 = vst [vmem:[%s163 + $0x280] sm:$0xff] %v1884
        %2157 = vst [vmem:[%s163 + $0x288] sm:$0xff] %v1885
        %2158 = vst [vmem:[%s163 + $0x290] sm:$0xff] %v1886
        %2159 = vst [vmem:[%s163 + $0x298] sm:$0xff] %v1887
        %2160 = vst [vmem:[%s163 + $0x2a0] sm:$0xff] %v1888
        %2161 = vst [vmem:[%s163 + $0x2a8] sm:$0xff] %v1889
        %2162 = vst [vmem:[%s163 + $0x2b0] sm:$0xff] %v1890
        %2163 = vst [vmem:[%s163 + $0x2b8] sm:$0xff] %v1891
        %2164 = vst [vmem:[%s163 + $0x2c0] sm:$0xff] %v1892
        %2165 = vst [vmem:[%s163 + $0x2c8] sm:$0xff] %v1893
        %2166 = vst [vmem:[%s163 + $0x2d0] sm:$0xff] %v1894
        %2167 = vst [vmem:[%s163 + $0x2d8] sm:$0xff] %v1895
        %2168 = vst [vmem:[%s163 + $0x2e0] sm:$0xff] %v1896
        %2169 = vst [vmem:[%s163 + $0x2e8] sm:$0xff] %v1897
        %2170 = vst [vmem:[%s163 + $0x2f0] sm:$0xff] %v1898
        %2171 = vst [vmem:[%s163 + $0x2f8] sm:$0xff] %v1899
        %2172 = vst [vmem:[%s163 + $0x300] sm:$0xff] %v1900
        %2173 = vst [vmem:[%s163 + $0x308] sm:$0xff] %v1901
        %2174 = vst [vmem:[%s163 + $0x310] sm:$0xff] %v1902
        %2175 = vst [vmem:[%s163 + $0x318] sm:$0xff] %v1903
        %2176 = vst [vmem:[%s163 + $0x320] sm:$0xff] %v1904
        %2177 = vst [vmem:[%s163 + $0x328] sm:$0xff] %v1905
        %2178 = vst [vmem:[%s163 + $0x330] sm:$0xff] %v1906
        %2179 = vst [vmem:[%s163 + $0x338] sm:$0xff] %v1907
        %2180 = vst [vmem:[%s163 + $0x340] sm:$0xff] %v1908
        %2181 = vst [vmem:[%s163 + $0x348] sm:$0xff] %v1909
        %2182 = vst [vmem:[%s163 + $0x350] sm:$0xff] %v1910
        %2183 = vst [vmem:[%s163 + $0x358] sm:$0xff] %v1911
        %2184 = vst [vmem:[%s163 + $0x360] sm:$0xff] %v1912
        %2185 = vst [vmem:[%s163 + $0x368] sm:$0xff] %v1913
        %2186 = vst [vmem:[%s163 + $0x370] sm:$0xff] %v1914
        %2187 = vst [vmem:[%s163 + $0x378] sm:$0xff] %v1915
        %2188 = vst [vmem:[%s163 + $0x380] sm:$0xff] %v1916
        %2189 = vst [vmem:[%s163 + $0x388] sm:$0xff] %v1917
        %2190 = vst [vmem:[%s163 + $0x390] sm:$0xff] %v1918
        %2191 = vst [vmem:[%s163 + $0x398] sm:$0xff] %v1919
        %2192 = vst [vmem:[%s163 + $0x3a0] sm:$0xff] %v1920
        %2193 = vst [vmem:[%s163 + $0x3a8] sm:$0xff] %v1921
        %2194 = vst [vmem:[%s163 + $0x3b0] sm:$0xff] %v1922
        %2195 = vst [vmem:[%s163 + $0x3b8] sm:$0xff] %v1923
        %2196 = vst [vmem:[%s163 + $0x3c0] sm:$0xff] %v1924
        %2197 = vst [vmem:[%s163 + $0x3c8] sm:$0xff] %v1925
        %2198 = vst [vmem:[%s163 + $0x3d0] sm:$0xff] %v1926
        %2199 = vst [vmem:[%s163 + $0x3d8] sm:$0xff] %v1927
        %2200 = vst [vmem:[%s163 + $0x3e0] sm:$0xff] %v1928
        %2201 = vst [vmem:[%s163 + $0x3e8] sm:$0xff] %v1929
        %2202 = vst [vmem:[%s163 + $0x3f0] sm:$0xff] %v1930
        %2203 = vst [vmem:[%s163 + $0x3f8] sm:$0xff] %v1931
        %2204 = vst [vmem:[%s163 + $0x400] sm:$0xff] %v1932
        %2205 = vst [vmem:[%s163 + $0x408] sm:$0xff] %v1933
        %2206 = vst [vmem:[%s163 + $0x410] sm:$0xff] %v1934
        %2207 = vst [vmem:[%s163 + $0x418] sm:$0xff] %v1935
        %2208 = vst [vmem:[%s163 + $0x420] sm:$0xff] %v1936
        %2209 = vst [vmem:[%s163 + $0x428] sm:$0xff] %v1937
        %2210 = vst [vmem:[%s163 + $0x430] sm:$0xff] %v1938
        %2211 = vst [vmem:[%s163 + $0x438] sm:$0xff] %v1939
        %2212 = vst [vmem:[%s163 + $0x440] sm:$0xff] %v1940
        %2213 = vst [vmem:[%s163 + $0x448] sm:$0xff] %v1941
        %2214 = vst [vmem:[%s163 + $0x450] sm:$0xff] %v1942
        %2215 = vst [vmem:[%s163 + $0x458] sm:$0xff] %v1943
        %2216 = vst [vmem:[%s163 + $0x460] sm:$0xff] %v1944
        %2217 = vst [vmem:[%s163 + $0x468] sm:$0xff] %v1945
        %2218 = vst [vmem:[%s163 + $0x470] sm:$0xff] %v1946
        %2219 = vst [vmem:[%s163 + $0x478] sm:$0xff] %v1947
        %2220 = vst [vmem:[%s163 + $0x480] sm:$0xff] %v1948
        %2221 = vst [vmem:[%s163 + $0x488] sm:$0xff] %v1949
        %2222 = vst [vmem:[%s163 + $0x490] sm:$0xff] %v1950
        %2223 = vst [vmem:[%s163 + $0x498] sm:$0xff] %v1951
        %2224 = vst [vmem:[%s163 + $0x4a0] sm:$0xff] %v1952
        %2225 = vst [vmem:[%s163 + $0x4a8] sm:$0xff] %v1953
        %2226 = vst [vmem:[%s163 + $0x4b0] sm:$0xff] %v1954
        %2227 = vst [vmem:[%s163 + $0x4b8] sm:$0xff] %v1955
        %2228 = vst [vmem:[%s163 + $0x4c0] sm:$0xff] %v1956
        %2229 = vst [vmem:[%s163 + $0x4c8] sm:$0xff] %v1957
        %2230 = vst [vmem:[%s163 + $0x4d0] sm:$0xff] %v1958
        %2231 = vst [vmem:[%s163 + $0x4d8] sm:$0xff] %v1959
        %2232 = vst [vmem:[%s163 + $0x4e0] sm:$0xff] %v1960
        %2233 = vst [vmem:[%s163 + $0x4e8] sm:$0xff] %v1961
        %2234 = vst [vmem:[%s163 + $0x4f0] sm:$0xff] %v1962
        %2235 = vst [vmem:[%s163 + $0x4f8] sm:$0xff] %v1963
        %2236 = vst [vmem:[%s163 + $0x500] sm:$0xff] %v1964
        %2237 = vst [vmem:[%s163 + $0x508] sm:$0xff] %v1965
        %2238 = vst [vmem:[%s163 + $0x510] sm:$0xff] %v1966
        %2239 = vst [vmem:[%s163 + $0x518] sm:$0xff] %v1967
        %2240 = vst [vmem:[%s163 + $0x520] sm:$0xff] %v1968
        %2241 = vst [vmem:[%s163 + $0x528] sm:$0xff] %v1969
        %2242 = vst [vmem:[%s163 + $0x530] sm:$0xff] %v1970
        %2243 = vst [vmem:[%s163 + $0x538] sm:$0xff] %v1971
        %2244 = vst [vmem:[%s163 + $0x540] sm:$0xff] %v1972
        %2245 = vst [vmem:[%s163 + $0x548] sm:$0xff] %v1973
        %2246 = vst [vmem:[%s163 + $0x550] sm:$0xff] %v1974
        %2247 = vst [vmem:[%s163 + $0x558] sm:$0xff] %v1975
        %2248 = vst [vmem:[%s163 + $0x560] sm:$0xff] %v1976
        %2249 = vst [vmem:[%s163 + $0x568] sm:$0xff] %v1977
        %2250 = vst [vmem:[%s163 + $0x570] sm:$0xff] %v1978
        %2251 = vst [vmem:[%s163 + $0x578] sm:$0xff] %v1979
        %2252 = vst [vmem:[%s163 + $0x580] sm:$0xff] %v1980
        %2253 = vst [vmem:[%s163 + $0x588] sm:$0xff] %v1981
        %2254 = vst [vmem:[%s163 + $0x590] sm:$0xff] %v1982
        %2255 = vst [vmem:[%s163 + $0x598] sm:$0xff] %v1983
        %2256 = vst [vmem:[%s163 + $0x5a0] sm:$0xff] %v1984
        %2257 = vst [vmem:[%s163 + $0x5a8] sm:$0xff] %v1985
        %2258 = vst [vmem:[%s163 + $0x5b0] sm:$0xff] %v1986
        %2259 = vst [vmem:[%s163 + $0x5b8] sm:$0xff] %v1987
        %2260 = vst [vmem:[%s163 + $0x5c0] sm:$0xff] %v1988
        %2261 = vst [vmem:[%s163 + $0x5c8] sm:$0xff] %v1989
        %2262 = vst [vmem:[%s163 + $0x5d0] sm:$0xff] %v1990
        %2263 = vst [vmem:[%s163 + $0x5d8] sm:$0xff] %v1991
        %2264 = vst [vmem:[%s163 + $0x5e0] sm:$0xff] %v1992
        %2265 = vst [vmem:[%s163 + $0x5e8] sm:$0xff] %v1993
        %2266 = vst [vmem:[%s163 + $0x5f0] sm:$0xff] %v1994
        %2267 = vst [vmem:[%s163 + $0x5f8] sm:$0xff] %v1995
        %2268 = vst [vmem:[%s163 + $0x600] sm:$0xff] %v1996
        %2269 = vst [vmem:[%s163 + $0x608] sm:$0xff] %v1997
        %2270 = vst [vmem:[%s163 + $0x610] sm:$0xff] %v1998
        %2271 = vst [vmem:[%s163 + $0x618] sm:$0xff] %v1999
        %2272 = vst [vmem:[%s163 + $0x620] sm:$0xff] %v2000
        %2273 = vst [vmem:[%s163 + $0x628] sm:$0xff] %v2001
        %2274 = vst [vmem:[%s163 + $0x630] sm:$0xff] %v2002
        %2275 = vst [vmem:[%s163 + $0x638] sm:$0xff] %v2003
        %2276 = vst [vmem:[%s163 + $0x640] sm:$0xff] %v2004
        %2277 = vst [vmem:[%s163 + $0x648] sm:$0xff] %v2005
        %2278 = vst [vmem:[%s163 + $0x650] sm:$0xff] %v2006
        %2279 = vst [vmem:[%s163 + $0x658] sm:$0xff] %v2007
        %2280 = vst [vmem:[%s163 + $0x660] sm:$0xff] %v2008
        %2281 = vst [vmem:[%s163 + $0x668] sm:$0xff] %v2009
        %2282 = vst [vmem:[%s163 + $0x670] sm:$0xff] %v2010
        %2283 = vst [vmem:[%s163 + $0x678] sm:$0xff] %v2011
        %2284 = vst [vmem:[%s163 + $0x680] sm:$0xff] %v2012
        %2285 = vst [vmem:[%s163 + $0x688] sm:$0xff] %v2013
        %2286 = vst [vmem:[%s163 + $0x690] sm:$0xff] %v2014
        %2287 = vst [vmem:[%s163 + $0x698] sm:$0xff] %v2015
        %2288 = vst [vmem:[%s163 + $0x6a0] sm:$0xff] %v2016
        %2289 = vst [vmem:[%s163 + $0x6a8] sm:$0xff] %v2017
        %2290 = vst [vmem:[%s163 + $0x6b0] sm:$0xff] %v2018
        %2291 = vst [vmem:[%s163 + $0x6b8] sm:$0xff] %v2019
        %2292 = vst [vmem:[%s163 + $0x6c0] sm:$0xff] %v2020
        %2293 = vst [vmem:[%s163 + $0x6c8] sm:$0xff] %v2021
        %2294 = vst [vmem:[%s163 + $0x6d0] sm:$0xff] %v2022
        %2295 = vst [vmem:[%s163 + $0x6d8] sm:$0xff] %v2023
        %2296 = vst [vmem:[%s163 + $0x6e0] sm:$0xff] %v2024
        %2297 = vst [vmem:[%s163 + $0x6e8] sm:$0xff] %v2025
        %2298 = vst [vmem:[%s163 + $0x6f0] sm:$0xff] %v2026
        %2299 = vst [vmem:[%s163 + $0x6f8] sm:$0xff] %v2027
        %2300 = vst [vmem:[%s163 + $0x700] sm:$0xff] %v2028
        %2301 = vst [vmem:[%s163 + $0x708] sm:$0xff] %v2029
        %2302 = vst [vmem:[%s163 + $0x710] sm:$0xff] %v2030
        %2303 = vst [vmem:[%s163 + $0x718] sm:$0xff] %v2031
        %2304 = vst [vmem:[%s163 + $0x720] sm:$0xff] %v2032
        %2305 = vst [vmem:[%s163 + $0x728] sm:$0xff] %v2033
        %2306 = vst [vmem:[%s163 + $0x730] sm:$0xff] %v2034
        %2307 = vst [vmem:[%s163 + $0x738] sm:$0xff] %v2035
        %2308 = vst [vmem:[%s163 + $0x740] sm:$0xff] %v2036
        %2309 = vst [vmem:[%s163 + $0x748] sm:$0xff] %v2037
        %2310 = vst [vmem:[%s163 + $0x750] sm:$0xff] %v2038
        %2311 = vst [vmem:[%s163 + $0x758] sm:$0xff] %v2039
        %2312 = vst [vmem:[%s163 + $0x760] sm:$0xff] %v2040
        %2313 = vst [vmem:[%s163 + $0x768] sm:$0xff] %v2041
        %2314 = vst [vmem:[%s163 + $0x770] sm:$0xff] %v2042
        %2315 = vst [vmem:[%s163 + $0x778] sm:$0xff] %v2043
        %2316 = vst [vmem:[%s163 + $0x780] sm:$0xff] %v2044
        %2317 = vst [vmem:[%s163 + $0x788] sm:$0xff] %v2045
        %2318 = vst [vmem:[%s163 + $0x790] sm:$0xff] %v2046
        %2319 = vst [vmem:[%s163 + $0x798] sm:$0xff] %v2047
        %2320 = vst [vmem:[%s163 + $0x7a0] sm:$0xff] %v2048
        %2321 = vst [vmem:[%s163 + $0x7a8] sm:$0xff] %v2049
        %2322 = vst [vmem:[%s163 + $0x7b0] sm:$0xff] %v2050
        %2323 = vst [vmem:[%s163 + $0x7b8] sm:$0xff] %v2051
        %2324 = vst [vmem:[%s163 + $0x7c0] sm:$0xff] %v2052
        %2325 = vst [vmem:[%s163 + $0x7c8] sm:$0xff] %v2053
        %2326 = vst [vmem:[%s163 + $0x7d0] sm:$0xff] %v2054
        %2327 = vst [vmem:[%s163 + $0x7d8] sm:$0xff] %v2055
        %2328 = vst [vmem:[%s163 + $0x7e0] sm:$0xff] %v2056
        %2329 = vst [vmem:[%s163 + $0x7e8] sm:$0xff] %v2057
        %2330 = vst [vmem:[%s163 + $0x7f0] sm:$0xff] %v2058
        %2331 = vst [vmem:[%s163 + $0x7f8] sm:$0xff] %v2059
        %2332 = vst [vmem:[%s163 + $0x800] sm:$0xff] %v2060
        %2333 = vst [vmem:[%s163 + $0x808] sm:$0xff] %v2061
        %2334 = vst [vmem:[%s163 + $0x810] sm:$0xff] %v2062
        %2335 = vst [vmem:[%s163 + $0x818] sm:$0xff] %v2063
        %2336 = vst [vmem:[%s163 + $0x820] sm:$0xff] %v2064
        %2337 = vst [vmem:[%s163 + $0x828] sm:$0xff] %v2065
        %2338 = vst [vmem:[%s163 + $0x830] sm:$0xff] %v2066
        %2339 = vst [vmem:[%s163 + $0x838] sm:$0xff] %v2067
        %2340 = vst [vmem:[%s163 + $0x840] sm:$0xff] %v2068
        %2341 = vst [vmem:[%s163 + $0x848] sm:$0xff] %v2069
        %2342 = vst [vmem:[%s163 + $0x850] sm:$0xff] %v2070
        %2343 = vst [vmem:[%s163 + $0x858] sm:$0xff] %v2071
        %2344 = vst [vmem:[%s163 + $0x860] sm:$0xff] %v2072
        %2345 = vst [vmem:[%s163 + $0x868] sm:$0xff] %v2073
        %2346 = vst [vmem:[%s163 + $0x870] sm:$0xff] %v2074
        %2347 = vst [vmem:[%s163 + $0x878] sm:$0xff] %v2075
        %s2348 = sand.u32 %s75, 1
        %s2349 = scalar_lea.sflag [#allocation5], %s2348
        %s2350 = sand.u32 %s75, 1
        %s2351 = smul.addr %s2350, 2176
        %s2352 = scalar_lea.vmem [#allocation6], %s2351
        // Predicated region
        $region33: #{tpu_custom_call.1} parent=27 // pred_check
          %p2353 = pneg %p85
        $region34: #{tpu_custom_call.1} parent=27 // pred_check_branch
          %2355 = sbr.rel (%p2353) target = $region36
        $region35: #{tpu_custom_call.1} parent=27 // pred_region
          %s2356 = smul.u32 34, %s20
          %s2358 = ssub.s32 34816, 34816
          %2359 = vsyncadd %s2349, %s2358
          %s2360 = smul.addr %s2356, 8
          %s2361 = smul.addr %s2360, 128
          %s2362 = scalar_lea.hbm %s2, %s2361
          %s2363 = sshll.u32 %s2352, 4
          %s2364 = int_to_ptr.vmem [resolvable:$true] %s2363
          %2369 = dma.vmem_to_hbm [thread:$0]  %s2364, 34816, %s2362, %s2349, 1024, 1024, 64
        $region36: #{tpu_custom_call.1} parent=27 // pred_fallthru
          _
      $region28: #{tpu_custom_call.1} parent=5 // pred_fallthru
        _
      %p2370 = scmp.le.s32.totalorder 2, %s15
      // Predicated region
      $region37: #{tpu_custom_call.1} parent=5 // pred_check
        %p2371 = pneg %p2370
      $region38: #{tpu_custom_call.1} parent=5 // pred_check_branch
        %2373 = sbr.rel (%p2371) target = $region40
      $region39: #{tpu_custom_call.1} parent=5 // pred_region
        %s2374 = ssub.s32 %s15, 2
        // Predicated region
        $region41: #{tpu_custom_call.1} parent=39 // pred_check
          %p2375 = pneg %p91
        $region42: #{tpu_custom_call.1} parent=39 // pred_check_branch
          %2377 = sbr.rel (%p2375) target = $region44
        $region43: #{tpu_custom_call.1} parent=39 // pred_region
          %s2378 = sand.u32 %s76, 1
          %s2379 = scalar_lea.sflag [#allocation5], %s2378
          %s2380 = sand.u32 %s76, 1
          %s2381 = smul.addr %s2380, 2176
          %s2382 = scalar_lea.vmem [#allocation6], %s2381
          %2383 = dma.done %s2379, 34816
        $region44: #{tpu_custom_call.1} parent=39 // pred_fallthru
          _
      $region40: #{tpu_custom_call.1} parent=5 // pred_fallthru
        _
    $region6: #{tpu_custom_call.1} parent=1 // loop_footer
      %s19 = sadd.s32 1, %s15
    $region7: #{tpu_custom_call.1} parent=1 // loop_footer_branch
      %14 = sbr.rel target = $region3
    $region8: #{tpu_custom_call.1} parent=1 // loop_exit
      _
    %2384 = vsyncpa [#allocation4], 1
    %s2385 = scalar_lea.sflag [#allocation4], 1
    %2386 = vsyncpa %s2385, 1
    %2387 = vsyncpa [#allocation5], 1
    %s2388 = scalar_lea.sflag [#allocation5], 1
    %2389 = vsyncpa %s2388, 1

</llo_original>
